<compile_context>
chip_gen: v7x
topology: tpu7x:2x2x1
jax: 0.10.0
libtpu: 0.0.40
codegen_flags: <defaults>
</compile_context>

<pallas_src>
import math

import jax
import jax.numpy as jnp
from jax.experimental import pallas as pl
from jax.experimental.pallas import tpu as pltpu  # noqa: F401 (kept for clarity)

# Small, BERT-consistent synthetic shapes.
B = 2            # batch
S = 8            # sequence length
H = 32           # hidden size
NUM_HEADS = 2
HEAD_DIM = H // NUM_HEADS
FFN = 4 * H
VOCAB = 100
VOCAB_PAD = 128  # pad vocab to a lane-dense 128 for the one-hot gather matmul
NUM_LAYERS = 2
NUM_LABELS = 5
OUT_PAD = 128    # lane-dense padded logits width
LN_EPS = 1e-12
BS = B * S


def _layernorm(x, gamma, beta):
    mu = jnp.mean(x, axis=-1, keepdims=True)
    var = jnp.mean((x - mu) ** 2, axis=-1, keepdims=True)
    return (x - mu) * jax.lax.rsqrt(var + LN_EPS) * gamma + beta


def _softmax_attn(s):
    # Attention softmax: approx reciprocal is fine here (EUP slot, ~1e-3 err).
    s = s - jnp.max(s, axis=-1, keepdims=True)
    e = jnp.exp(s)
    return e * pl.reciprocal(jnp.sum(e, axis=-1, keepdims=True), approx=True)


def _gelu_tanh(x):
    # TODO(synk): tanh-approx GELU instead of nn.GELU's exact erf form; single
    # EUP tanh, abs error ~1e-3, below the bf16 matmul noise floor.
    c = math.sqrt(2.0 / math.pi)
    return 0.5 * x * (1.0 + jnp.tanh(c * (x + 0.044715 * x * x * x)))


# --------------------------------------------------------------------------
# Single fused Pallas kernel: embedding + 2 encoder layers + classifier.
# --------------------------------------------------------------------------
def bert_fused_kernel(ids_ref, bias_ref, tok_emb_ref, pos_type_ref, embln_ref,
                      wqkv_ref, bqkv_ref, wo_ref, vecs_ref,
                      w1_ref, b1_ref, w2_ref,
                      cw_ref, cb_ref, cw4_ref, cb4_ref,
                      out_ref):
    scale = 1.0 / math.sqrt(HEAD_DIM)

    # ---- Embedding: one-hot gather on the MXU + (pos+type) add + layernorm.
    # TODO(synk): one-hot bf16 matmul rounds embedding values to bf16 (~0.4%
    # rel err); exact-f32 table gather would need a DMA gather.
    vocab_iota = jax.lax.broadcasted_iota(jnp.int32, (BS, VOCAB_PAD), 1)
    one_hot = (vocab_iota == ids_ref[...]).astype(jnp.bfloat16)       # [BS, Vp]
    x = jnp.dot(one_hot, tok_emb_ref[...],
                preferred_element_type=jnp.float32) + pos_type_ref[...]
    x = _layernorm(x, embln_ref[0:1, :], embln_ref[1:2, :])           # [BS, H]

    bias = bias_ref[...]        # [BS, BS] additive block-diag + key-mask bias

    for l in range(NUM_LAYERS):                    # static unroll over layers
        vecs = vecs_ref[l]                         # [6, H]: bo,g1,be1,b2,g2,be2

        # Fused QKV projection: one [BS,H] x [H,3H] bf16 matmul, f32 accumulate.
        qkv = jnp.dot(x.astype(jnp.bfloat16), wqkv_ref[l],
                      preferred_element_type=jnp.float32) + bqkv_ref[l]

        # Per-head attention on flat [BS, *] slabs; output projection folded
        # into the head loop (sum over heads), leading-axis wo indexing.
        attn = jnp.zeros((BS, H), jnp.float32)
        for h in range(NUM_HEADS):                 # static unroll over heads
            lo = h * HEAD_DIM
            qh = qkv[:, lo:lo + HEAD_DIM].astype(jnp.bfloat16)
            kh = qkv[:, H + lo:H + lo + HEAD_DIM].astype(jnp.bfloat16)
            vh = qkv[:, 2 * H + lo:2 * H + lo + HEAD_DIM].astype(jnp.bfloat16)
            s = jax.lax.dot_general(                       # qh · khᵀ  [BS,BS]
                qh, kh, (((1,), (1,)), ((), ())),
                preferred_element_type=jnp.float32) * scale + bias
            p = _softmax_attn(s)                           # [BS, BS] f32
            ctx = jnp.dot(p.astype(jnp.bfloat16), vh,
                          preferred_element_type=jnp.float32)
            attn = attn + jnp.dot(ctx.astype(jnp.bfloat16),
                                  wo_ref[l * NUM_HEADS + h],
                                  preferred_element_type=jnp.float32)
        attn = attn + vecs[0:1, :]                 # output-projection bias
        x = _layernorm(x + attn, vecs[1:2, :], vecs[2:3, :])

        # Feed-forward (tanh-GELU on EUP), residual, layernorm.
        h1 = jnp.dot(x.astype(jnp.bfloat16), w1_ref[l],
                     preferred_element_type=jnp.float32) + b1_ref[l]
        h1 = _gelu_tanh(h1)
        ffn = jnp.dot(h1.astype(jnp.bfloat16), w2_ref[l],
                      preferred_element_type=jnp.float32) + vecs[3:4, :]
        x = _layernorm(x + ffn, vecs[4:5, :], vecs[5:6, :])

    # ---- Classifier: 3x (Linear + ReLU) on the full [BS, H] slab.
    # TODO(synk): nn.Dropout layers are identity at inference; training-mode
    # RNG dropout not implemented.
    hcl = x
    for i in range(3):
        hcl = jnp.maximum(
            jnp.dot(hcl.astype(jnp.bfloat16), cw_ref[i],
                    preferred_element_type=jnp.float32) + cb_ref[i:i + 1, :],
            0.0)

    # CLS rows (last_hidden_state[:, 0, :]) only for the final projection.
    cls = jnp.concatenate([hcl[b * S:b * S + 1, :] for b in range(B)], axis=0)
    logits = jnp.dot(cls.astype(jnp.bfloat16), cw4_ref[...],
                     preferred_element_type=jnp.float32) + cb4_ref[...]
    # Exact softmax for the final output (padded lanes hold -1e9 -> prob 0).
    logits = logits - jnp.max(logits, axis=-1, keepdims=True)
    e = jnp.exp(logits)
    out_ref[...] = e / jnp.sum(e, axis=-1, keepdims=True)   # [B, OUT_PAD]


def bert_fused_forward(ids, attn_bias, pk):
    return pl.pallas_call(
        bert_fused_kernel,
        out_shape=jax.ShapeDtypeStruct((B, OUT_PAD), jnp.float32),
    )(ids, attn_bias, pk["tok_emb"], pk["pos_type"], pk["emb_ln"],
      pk["wqkv"], pk["bqkv"], pk["wo"], pk["vecs"],
      pk["w1"], pk["b1"], pk["w2"],
      pk["cw"], pk["cb"], pk["cw4"], pk["cb4"])


# --------------------------------------------------------------------------
# Parameter init (deterministic, synthetic), host-side packing, full forward.
# --------------------------------------------------------------------------
def init_params(key):
    keys = iter(jax.random.split(key, 128))

    def w(shape, scale=0.02):
        return (scale * jax.random.normal(next(keys), shape)).astype(jnp.float32)

    def layer_params():
        return dict(
            wq=w((H, H)), bq=w((1, H)), wk=w((H, H)), bk=w((1, H)),
            wv=w((H, H)), bv=w((1, H)), wo=w((H, H)), bo=w((1, H)),
            g1=jnp.ones((1, H), jnp.float32), be1=jnp.zeros((1, H), jnp.float32),
            w1=w((H, FFN)), b1=w((1, FFN)), w2=w((FFN, H)), b2=w((1, H)),
            g2=jnp.ones((1, H), jnp.float32), be2=jnp.zeros((1, H), jnp.float32),
        )

    return dict(
        tok_emb=w((VOCAB, H)), pos_emb=w((S, H)), type_emb=w((1, H)),
        emb_g=jnp.ones((1, H), jnp.float32), emb_b=jnp.zeros((1, H), jnp.float32),
        layers=[layer_params() for _ in range(NUM_LAYERS)],
        clf=dict(
            w1=w((H, H)), b1=w((1, H)),
            w2=w((H, H)), b2=w((1, H)),
            w3=w((H, H)), b3=w((1, H)),
            w4=w((H, NUM_LABELS)), b4=w((1, NUM_LABELS)),
        ),
    )


def pack_params(p):
    """Host-side (one-time) fusion/packing of weights into a few kernel inputs."""
    bf = jnp.bfloat16
    layers = p["layers"]
    clf = p["clf"]
    return dict(
        # [VOCAB_PAD, H] bf16: padded token table for the in-kernel one-hot gather.
        tok_emb=jnp.pad(p["tok_emb"],
                        ((0, VOCAB_PAD - VOCAB), (0, 0))).astype(bf),
        # [BS, H] f32: pos + type embeddings, pre-summed and tiled over batch.
        pos_type=jnp.tile(p["pos_emb"] + p["type_emb"], (B, 1)),
        emb_ln=jnp.concatenate([p["emb_g"], p["emb_b"]], axis=0),            # [2,H]
        wqkv=jnp.stack([jnp.concatenate([lp["wq"], lp["wk"], lp["wv"]], axis=1)
                        for lp in layers]).astype(bf),                       # [L,H,3H]
        bqkv=jnp.stack([jnp.concatenate([lp["bq"], lp["bk"], lp["bv"]], axis=1)
                        for lp in layers]),                                  # [L,1,3H]
        # Output projection repacked per head: [L*NUM_HEADS, HEAD_DIM, H].
        wo=jnp.stack([lp["wo"].reshape(NUM_HEADS, HEAD_DIM, H)
                      for lp in layers]
                     ).reshape(NUM_LAYERS * NUM_HEADS, HEAD_DIM, H).astype(bf),
        vecs=jnp.stack([jnp.concatenate([lp["bo"], lp["g1"], lp["be1"],
                                         lp["b2"], lp["g2"], lp["be2"]], axis=0)
                        for lp in layers]),                                  # [L,6,H]
        w1=jnp.stack([lp["w1"] for lp in layers]).astype(bf),                # [L,H,FFN]
        b1=jnp.stack([lp["b1"] for lp in layers]),                           # [L,1,FFN]
        w2=jnp.stack([lp["w2"] for lp in layers]).astype(bf),                # [L,FFN,H]
        cw=jnp.stack([clf["w1"], clf["w2"], clf["w3"]]).astype(bf),          # [3,H,H]
        cb=jnp.concatenate([clf["b1"], clf["b2"], clf["b3"]], axis=0),       # [3,H]
        # Final projection padded to 128 lanes; padded bias = -1e9 -> prob 0.
        cw4=jnp.pad(clf["w4"],
                    ((0, 0), (0, OUT_PAD - NUM_LABELS))).astype(bf),         # [H,128]
        cb4=jnp.pad(clf["b4"], ((0, 0), (0, OUT_PAD - NUM_LABELS)),
                    constant_values=-1e9),                                   # [1,128]
    )


def bert_forward(packed, input_id, mask):
    # Tiny host-side glue: flatten ids and build the [BS, BS] additive
    # attention bias (block-diagonal same-batch mask AND key padding mask).
    ids = input_id.reshape(BS, 1).astype(jnp.int32)
    rows = jnp.arange(BS) // S
    same_batch = rows[:, None] == rows[None, :]
    key_ok = (mask.reshape(BS) > 0)[None, :]
    attn_bias = jnp.where(same_batch & key_ok, 0.0, -1e9).astype(jnp.float32)
    probs_padded = bert_fused_forward(ids, attn_bias, packed)
    return probs_padded[:, :NUM_LABELS]


if __name__ == "__main__":
    key = jax.random.PRNGKey(0)
    k_param, k_ids = jax.random.split(key)
    params = init_params(k_param)
    packed = pack_params(params)

    input_id = jax.random.randint(k_ids, (B, S), 0, VOCAB, dtype=jnp.int32)
    mask = jnp.ones((B, S), dtype=jnp.int32)

    probs = bert_forward(packed, input_id, mask)
    jax.block_until_ready(probs)
    assert probs.shape == (B, NUM_LABELS)
    print("KERNEL_OK")
</pallas_src>

<mosaic_0001>
module attributes {stable_mosaic.version = 11 : i64} {
  func.func @bert_fused_kernel(%arg0: memref<16x1xi32, #tpu.memory_space<vmem>>, %arg1: memref<16x16xf32, #tpu.memory_space<vmem>>, %arg2: memref<128x32xbf16, #tpu.memory_space<vmem>>, %arg3: memref<16x32xf32, #tpu.memory_space<vmem>>, %arg4: memref<2x32xf32, #tpu.memory_space<vmem>>, %arg5: memref<2x32x96xbf16, #tpu.memory_space<vmem>>, %arg6: memref<2x1x96xf32, #tpu.memory_space<vmem>>, %arg7: memref<4x16x32xbf16, #tpu.memory_space<vmem>>, %arg8: memref<2x6x32xf32, #tpu.memory_space<vmem>>, %arg9: memref<2x32x128xbf16, #tpu.memory_space<vmem>>, %arg10: memref<2x1x128xf32, #tpu.memory_space<vmem>>, %arg11: memref<2x128x32xbf16, #tpu.memory_space<vmem>>, %arg12: memref<3x32x32xbf16, #tpu.memory_space<vmem>>, %arg13: memref<3x32xf32, #tpu.memory_space<vmem>>, %arg14: memref<32x128xbf16, #tpu.memory_space<vmem>>, %arg15: memref<1x128xf32, #tpu.memory_space<vmem>>, %arg16: memref<2x128xf32, #tpu.memory_space<vmem>>) attributes {dimension_semantics = [], scalar_prefetch = 0 : i64, scratch_operands = 0 : i64, tpu.core_type = #tpu.core_type<tc>} {
    %0 = tpu.iota {dimensions = array<i32: 1>} : vector<16x128xi32>
    %c0 = arith.constant 0 : index
    %c0_0 = arith.constant 0 : index
    %1 = vector.load %arg0[%c0, %c0_0] : memref<16x1xi32, #tpu.memory_space<vmem>>, vector<16x1xi32>
    %2 = vector.broadcast %1 : vector<16x1xi32> to vector<16x128xi32>
    %3 = arith.cmpi eq, %0, %2 : vector<16x128xi32>
    %4 = arith.extui %3 : vector<16x128xi1> to vector<16x128xi32>
    %5 = arith.sitofp %4 : vector<16x128xi32> to vector<16x128xf32>
    %6 = arith.truncf %5 : vector<16x128xf32> to vector<16x128xbf16>
    %c0_1 = arith.constant 0 : index
    %c0_2 = arith.constant 0 : index
    %7 = vector.load %arg2[%c0_1, %c0_2] : memref<128x32xbf16, #tpu.memory_space<vmem>>, vector<128x32xbf16>
    %cst = arith.constant dense<0.000000e+00> : vector<16x32xf32>
    %8 = tpu.matmul %6, %7, %cst {dimension_numbers = #tpu.dot_dimension_numbers<[1], [0], [0], [1], [0, 0, 1, 1], [], []>} : vector<16x128xbf16>, vector<128x32xbf16>, vector<16x32xf32> -> vector<16x32xf32>
    %c0_3 = arith.constant 0 : index
    %c0_4 = arith.constant 0 : index
    %9 = vector.load %arg3[%c0_3, %c0_4] : memref<16x32xf32, #tpu.memory_space<vmem>>, vector<16x32xf32>
    %10 = arith.addf %8, %9 : vector<16x32xf32>
    %c0_5 = arith.constant 0 : index
    %c0_6 = arith.constant 0 : index
    %11 = vector.load %arg4[%c0_5, %c0_6] : memref<2x32xf32, #tpu.memory_space<vmem>>, vector<1x32xf32>
    %c1 = arith.constant 1 : index
    %c0_7 = arith.constant 0 : index
    %12 = vector.load %arg4[%c1, %c0_7] : memref<2x32xf32, #tpu.memory_space<vmem>>, vector<1x32xf32>
    %cst_8 = arith.constant dense<0.000000e+00> : vector<16xf32>
    %13 = vector.multi_reduction <add>, %10, %cst_8 [1] : vector<16x32xf32> to vector<16xf32>
    %14 = vector.shape_cast %13 : vector<16xf32> to vector<16x1xf32>
    %cst_9 = arith.constant 3.200000e+01 : f32
    %15 = vector.broadcast %cst_9 : f32 to vector<16x1xf32>
    %16 = arith.divf %14, %15 : vector<16x1xf32>
    %17 = vector.broadcast %16 : vector<16x1xf32> to vector<16x32xf32>
    %18 = arith.subf %10, %17 : vector<16x32xf32>
    %19 = arith.mulf %18, %18 : vector<16x32xf32>
    %cst_10 = arith.constant dense<0.000000e+00> : vector<16xf32>
    %20 = vector.multi_reduction <add>, %19, %cst_10 [1] : vector<16x32xf32> to vector<16xf32>
    %21 = vector.shape_cast %20 : vector<16xf32> to vector<16x1xf32>
    %cst_11 = arith.constant 3.200000e+01 : f32
    %22 = vector.broadcast %cst_11 : f32 to vector<16x1xf32>
    %23 = arith.divf %21, %22 : vector<16x1xf32>
    %24 = vector.broadcast %16 : vector<16x1xf32> to vector<16x32xf32>
    %25 = arith.subf %10, %24 : vector<16x32xf32>
    %cst_12 = arith.constant 9.99999996E-13 : f32
    %26 = vector.broadcast %cst_12 : f32 to vector<16x1xf32>
    %27 = arith.addf %23, %26 : vector<16x1xf32>
    %28 = math.rsqrt %27 : vector<16x1xf32>
    %29 = vector.broadcast %28 : vector<16x1xf32> to vector<16x32xf32>
    %30 = arith.mulf %25, %29 : vector<16x32xf32>
    %31 = vector.broadcast %11 : vector<1x32xf32> to vector<16x32xf32>
    %32 = arith.mulf %30, %31 : vector<16x32xf32>
    %33 = vector.broadcast %12 : vector<1x32xf32> to vector<16x32xf32>
    %34 = arith.addf %32, %33 : vector<16x32xf32>
    %c0_13 = arith.constant 0 : index
    %c0_14 = arith.constant 0 : index
    %35 = vector.load %arg1[%c0_13, %c0_14] : memref<16x16xf32, #tpu.memory_space<vmem>>, vector<16x16xf32>
    %c0_15 = arith.constant 0 : index
    %c0_16 = arith.constant 0 : index
    %c0_17 = arith.constant 0 : index
    %36 = vector.load %arg8[%c0_15, %c0_16, %c0_17] : memref<2x6x32xf32, #tpu.memory_space<vmem>>, vector<1x6x32xf32>
    %37 = vector.shape_cast %36 : vector<1x6x32xf32> to vector<6x32xf32>
    %38 = arith.truncf %34 : vector<16x32xf32> to vector<16x32xbf16>
    %c0_18 = arith.constant 0 : index
    %c0_19 = arith.constant 0 : index
    %c0_20 = arith.constant 0 : index
    %39 = vector.load %arg5[%c0_18, %c0_19, %c0_20] : memref<2x32x96xbf16, #tpu.memory_space<vmem>>, vector<1x32x96xbf16>
    %40 = vector.shape_cast %39 : vector<1x32x96xbf16> to vector<32x96xbf16>
    %cst_21 = arith.constant dense<0.000000e+00> : vector<16x96xf32>
    %41 = tpu.matmul %38, %40, %cst_21 {dimension_numbers = #tpu.dot_dimension_numbers<[1], [0], [0], [1], [0, 0, 1, 1], [], []>} : vector<16x32xbf16>, vector<32x96xbf16>, vector<16x96xf32> -> vector<16x96xf32>
    %c0_22 = arith.constant 0 : index
    %c0_23 = arith.constant 0 : index
    %c0_24 = arith.constant 0 : index
    %42 = vector.load %arg6[%c0_22, %c0_23, %c0_24] : memref<2x1x96xf32, #tpu.memory_space<vmem>>, vector<1x1x96xf32>
    %43 = vector.shape_cast %42 : vector<1x1x96xf32> to vector<1x96xf32>
    %44 = vector.broadcast %43 : vector<1x96xf32> to vector<16x96xf32>
    %45 = arith.addf %41, %44 : vector<16x96xf32>
    %cst_25 = arith.constant 0.000000e+00 : f32
    %46 = vector.broadcast %cst_25 : f32 to vector<16x32xf32>
    %47 = vector.extract_strided_slice %45 {offsets = [0, 0], sizes = [16, 16], strides = [1, 1]} : vector<16x96xf32> to vector<16x16xf32>
    %48 = arith.truncf %47 : vector<16x16xf32> to vector<16x16xbf16>
    %49 = vector.extract_strided_slice %45 {offsets = [0, 32], sizes = [16, 16], strides = [1, 1]} : vector<16x96xf32> to vector<16x16xf32>
    %50 = arith.truncf %49 : vector<16x16xf32> to vector<16x16xbf16>
    %51 = vector.extract_strided_slice %45 {offsets = [0, 64], sizes = [16, 16], strides = [1, 1]} : vector<16x96xf32> to vector<16x16xf32>
    %52 = arith.truncf %51 : vector<16x16xf32> to vector<16x16xbf16>
    %cst_26 = arith.constant dense<0.000000e+00> : vector<16x16xf32>
    %53 = tpu.matmul %48, %50, %cst_26 {dimension_numbers = #tpu.dot_dimension_numbers<[1], [1], [0], [0], [0, 0, 1, 0], [], []>} : vector<16x16xbf16>, vector<16x16xbf16>, vector<16x16xf32> -> vector<16x16xf32>
    %cst_27 = arith.constant 2.500000e-01 : f32
    %54 = vector.broadcast %cst_27 : f32 to vector<16x16xf32>
    %55 = arith.mulf %53, %54 : vector<16x16xf32>
    %56 = arith.addf %55, %35 : vector<16x16xf32>
    %cst_28 = arith.constant dense<0xFF800000> : vector<16xf32>
    %57 = vector.multi_reduction <maximumf>, %56, %cst_28 [1] : vector<16x16xf32> to vector<16xf32>
    %58 = vector.shape_cast %57 : vector<16xf32> to vector<16x1xf32>
    %59 = vector.broadcast %58 : vector<16x1xf32> to vector<16x16xf32>
    %60 = arith.subf %56, %59 : vector<16x16xf32>
    %61 = math.exp %60 : vector<16x16xf32>
    %cst_29 = arith.constant dense<0.000000e+00> : vector<16xf32>
    %62 = vector.multi_reduction <add>, %61, %cst_29 [1] : vector<16x16xf32> to vector<16xf32>
    %63 = vector.shape_cast %62 : vector<16xf32> to vector<16x1xf32>
    %64 = tpu.reciprocal %63 {approx = true} : vector<16x1xf32> -> vector<16x1xf32>
    %65 = vector.broadcast %64 : vector<16x1xf32> to vector<16x16xf32>
    %66 = arith.mulf %61, %65 : vector<16x16xf32>
    %67 = arith.truncf %66 : vector<16x16xf32> to vector<16x16xbf16>
    %cst_30 = arith.constant dense<0.000000e+00> : vector<16x16xf32>
    %68 = tpu.matmul %67, %52, %cst_30 {dimension_numbers = #tpu.dot_dimension_numbers<[1], [0], [0], [1], [0, 0, 1, 1], [], []>} : vector<16x16xbf16>, vector<16x16xbf16>, vector<16x16xf32> -> vector<16x16xf32>
    %69 = arith.truncf %68 : vector<16x16xf32> to vector<16x16xbf16>
    %c0_31 = arith.constant 0 : index
    %c0_32 = arith.constant 0 : index
    %c0_33 = arith.constant 0 : index
    %70 = vector.load %arg7[%c0_31, %c0_32, %c0_33] : memref<4x16x32xbf16, #tpu.memory_space<vmem>>, vector<1x16x32xbf16>
    %71 = vector.shape_cast %70 : vector<1x16x32xbf16> to vector<16x32xbf16>
    %cst_34 = arith.constant dense<0.000000e+00> : vector<16x32xf32>
    %72 = tpu.matmul %69, %71, %cst_34 {dimension_numbers = #tpu.dot_dimension_numbers<[1], [0], [0], [1], [0, 0, 1, 1], [], []>} : vector<16x16xbf16>, vector<16x32xbf16>, vector<16x32xf32> -> vector<16x32xf32>
    %73 = arith.addf %46, %72 : vector<16x32xf32>
    %74 = vector.extract_strided_slice %45 {offsets = [0, 16], sizes = [16, 16], strides = [1, 1]} : vector<16x96xf32> to vector<16x16xf32>
    %75 = arith.truncf %74 : vector<16x16xf32> to vector<16x16xbf16>
    %76 = vector.extract_strided_slice %45 {offsets = [0, 48], sizes = [16, 16], strides = [1, 1]} : vector<16x96xf32> to vector<16x16xf32>
    %77 = arith.truncf %76 : vector<16x16xf32> to vector<16x16xbf16>
    %78 = vector.extract_strided_slice %45 {offsets = [0, 80], sizes = [16, 16], strides = [1, 1]} : vector<16x96xf32> to vector<16x16xf32>
    %79 = arith.truncf %78 : vector<16x16xf32> to vector<16x16xbf16>
    %cst_35 = arith.constant dense<0.000000e+00> : vector<16x16xf32>
    %80 = tpu.matmul %75, %77, %cst_35 {dimension_numbers = #tpu.dot_dimension_numbers<[1], [1], [0], [0], [0, 0, 1, 0], [], []>} : vector<16x16xbf16>, vector<16x16xbf16>, vector<16x16xf32> -> vector<16x16xf32>
    %cst_36 = arith.constant 2.500000e-01 : f32
    %81 = vector.broadcast %cst_36 : f32 to vector<16x16xf32>
    %82 = arith.mulf %80, %81 : vector<16x16xf32>
    %83 = arith.addf %82, %35 : vector<16x16xf32>
    %cst_37 = arith.constant dense<0xFF800000> : vector<16xf32>
    %84 = vector.multi_reduction <maximumf>, %83, %cst_37 [1] : vector<16x16xf32> to vector<16xf32>
    %85 = vector.shape_cast %84 : vector<16xf32> to vector<16x1xf32>
    %86 = vector.broadcast %85 : vector<16x1xf32> to vector<16x16xf32>
    %87 = arith.subf %83, %86 : vector<16x16xf32>
    %88 = math.exp %87 : vector<16x16xf32>
    %cst_38 = arith.constant dense<0.000000e+00> : vector<16xf32>
    %89 = vector.multi_reduction <add>, %88, %cst_38 [1] : vector<16x16xf32> to vector<16xf32>
    %90 = vector.shape_cast %89 : vector<16xf32> to vector<16x1xf32>
    %91 = tpu.reciprocal %90 {approx = true} : vector<16x1xf32> -> vector<16x1xf32>
    %92 = vector.broadcast %91 : vector<16x1xf32> to vector<16x16xf32>
    %93 = arith.mulf %88, %92 : vector<16x16xf32>
    %94 = arith.truncf %93 : vector<16x16xf32> to vector<16x16xbf16>
    %cst_39 = arith.constant dense<0.000000e+00> : vector<16x16xf32>
    %95 = tpu.matmul %94, %79, %cst_39 {dimension_numbers = #tpu.dot_dimension_numbers<[1], [0], [0], [1], [0, 0, 1, 1], [], []>} : vector<16x16xbf16>, vector<16x16xbf16>, vector<16x16xf32> -> vector<16x16xf32>
    %96 = arith.truncf %95 : vector<16x16xf32> to vector<16x16xbf16>
    %c1_40 = arith.constant 1 : index
    %c0_41 = arith.constant 0 : index
    %c0_42 = arith.constant 0 : index
    %97 = vector.load %arg7[%c1_40, %c0_41, %c0_42] : memref<4x16x32xbf16, #tpu.memory_space<vmem>>, vector<1x16x32xbf16>
    %98 = vector.shape_cast %97 : vector<1x16x32xbf16> to vector<16x32xbf16>
    %cst_43 = arith.constant dense<0.000000e+00> : vector<16x32xf32>
    %99 = tpu.matmul %96, %98, %cst_43 {dimension_numbers = #tpu.dot_dimension_numbers<[1], [0], [0], [1], [0, 0, 1, 1], [], []>} : vector<16x16xbf16>, vector<16x32xbf16>, vector<16x32xf32> -> vector<16x32xf32>
    %100 = arith.addf %73, %99 : vector<16x32xf32>
    %101 = vector.extract_strided_slice %37 {offsets = [0, 0], sizes = [1, 32], strides = [1, 1]} : vector<6x32xf32> to vector<1x32xf32>
    %102 = vector.broadcast %101 : vector<1x32xf32> to vector<16x32xf32>
    %103 = arith.addf %100, %102 : vector<16x32xf32>
    %104 = arith.addf %34, %103 : vector<16x32xf32>
    %105 = vector.extract_strided_slice %37 {offsets = [1, 0], sizes = [1, 32], strides = [1, 1]} : vector<6x32xf32> to vector<1x32xf32>
    %106 = vector.extract_strided_slice %37 {offsets = [2, 0], sizes = [1, 32], strides = [1, 1]} : vector<6x32xf32> to vector<1x32xf32>
    %cst_44 = arith.constant dense<0.000000e+00> : vector<16xf32>
    %107 = vector.multi_reduction <add>, %104, %cst_44 [1] : vector<16x32xf32> to vector<16xf32>
    %108 = vector.shape_cast %107 : vector<16xf32> to vector<16x1xf32>
    %cst_45 = arith.constant 3.200000e+01 : f32
    %109 = vector.broadcast %cst_45 : f32 to vector<16x1xf32>
    %110 = arith.divf %108, %109 : vector<16x1xf32>
    %111 = vector.broadcast %110 : vector<16x1xf32> to vector<16x32xf32>
    %112 = arith.subf %104, %111 : vector<16x32xf32>
    %113 = arith.mulf %112, %112 : vector<16x32xf32>
    %cst_46 = arith.constant dense<0.000000e+00> : vector<16xf32>
    %114 = vector.multi_reduction <add>, %113, %cst_46 [1] : vector<16x32xf32> to vector<16xf32>
    %115 = vector.shape_cast %114 : vector<16xf32> to vector<16x1xf32>
    %cst_47 = arith.constant 3.200000e+01 : f32
    %116 = vector.broadcast %cst_47 : f32 to vector<16x1xf32>
    %117 = arith.divf %115, %116 : vector<16x1xf32>
    %118 = vector.broadcast %110 : vector<16x1xf32> to vector<16x32xf32>
    %119 = arith.subf %104, %118 : vector<16x32xf32>
    %cst_48 = arith.constant 9.99999996E-13 : f32
    %120 = vector.broadcast %cst_48 : f32 to vector<16x1xf32>
    %121 = arith.addf %117, %120 : vector<16x1xf32>
    %122 = math.rsqrt %121 : vector<16x1xf32>
    %123 = vector.broadcast %122 : vector<16x1xf32> to vector<16x32xf32>
    %124 = arith.mulf %119, %123 : vector<16x32xf32>
    %125 = vector.broadcast %105 : vector<1x32xf32> to vector<16x32xf32>
    %126 = arith.mulf %124, %125 : vector<16x32xf32>
    %127 = vector.broadcast %106 : vector<1x32xf32> to vector<16x32xf32>
    %128 = arith.addf %126, %127 : vector<16x32xf32>
    %129 = arith.truncf %128 : vector<16x32xf32> to vector<16x32xbf16>
    %c0_49 = arith.constant 0 : index
    %c0_50 = arith.constant 0 : index
    %c0_51 = arith.constant 0 : index
    %130 = vector.load %arg9[%c0_49, %c0_50, %c0_51] : memref<2x32x128xbf16, #tpu.memory_space<vmem>>, vector<1x32x128xbf16>
    %131 = vector.shape_cast %130 : vector<1x32x128xbf16> to vector<32x128xbf16>
    %cst_52 = arith.constant dense<0.000000e+00> : vector<16x128xf32>
    %132 = tpu.matmul %129, %131, %cst_52 {dimension_numbers = #tpu.dot_dimension_numbers<[1], [0], [0], [1], [0, 0, 1, 1], [], []>} : vector<16x32xbf16>, vector<32x128xbf16>, vector<16x128xf32> -> vector<16x128xf32>
    %c0_53 = arith.constant 0 : index
    %c0_54 = arith.constant 0 : index
    %c0_55 = arith.constant 0 : index
    %133 = vector.load %arg10[%c0_53, %c0_54, %c0_55] : memref<2x1x128xf32, #tpu.memory_space<vmem>>, vector<1x1x128xf32>
    %134 = vector.shape_cast %133 : vector<1x1x128xf32> to vector<1x128xf32>
    %135 = vector.broadcast %134 : vector<1x128xf32> to vector<16x128xf32>
    %136 = arith.addf %132, %135 : vector<16x128xf32>
    %cst_56 = arith.constant 5.000000e-01 : f32
    %137 = vector.broadcast %cst_56 : f32 to vector<16x128xf32>
    %138 = arith.mulf %137, %136 : vector<16x128xf32>
    %cst_57 = arith.constant 4.471500e-02 : f32
    %139 = vector.broadcast %cst_57 : f32 to vector<16x128xf32>
    %140 = arith.mulf %139, %136 : vector<16x128xf32>
    %141 = arith.mulf %140, %136 : vector<16x128xf32>
    %142 = arith.mulf %141, %136 : vector<16x128xf32>
    %143 = arith.addf %136, %142 : vector<16x128xf32>
    %cst_58 = arith.constant 0.797884583 : f32
    %144 = vector.broadcast %cst_58 : f32 to vector<16x128xf32>
    %145 = arith.mulf %144, %143 : vector<16x128xf32>
    %146 = math.tanh %145 : vector<16x128xf32>
    %cst_59 = arith.constant 1.000000e+00 : f32
    %147 = vector.broadcast %cst_59 : f32 to vector<16x128xf32>
    %148 = arith.addf %147, %146 : vector<16x128xf32>
    %149 = arith.mulf %138, %148 : vector<16x128xf32>
    %150 = arith.truncf %149 : vector<16x128xf32> to vector<16x128xbf16>
    %c0_60 = arith.constant 0 : index
    %c0_61 = arith.constant 0 : index
    %c0_62 = arith.constant 0 : index
    %151 = vector.load %arg11[%c0_60, %c0_61, %c0_62] : memref<2x128x32xbf16, #tpu.memory_space<vmem>>, vector<1x128x32xbf16>
    %152 = vector.shape_cast %151 : vector<1x128x32xbf16> to vector<128x32xbf16>
    %cst_63 = arith.constant dense<0.000000e+00> : vector<16x32xf32>
    %153 = tpu.matmul %150, %152, %cst_63 {dimension_numbers = #tpu.dot_dimension_numbers<[1], [0], [0], [1], [0, 0, 1, 1], [], []>} : vector<16x128xbf16>, vector<128x32xbf16>, vector<16x32xf32> -> vector<16x32xf32>
    %154 = vector.extract_strided_slice %37 {offsets = [3, 0], sizes = [1, 32], strides = [1, 1]} : vector<6x32xf32> to vector<1x32xf32>
    %155 = vector.broadcast %154 : vector<1x32xf32> to vector<16x32xf32>
    %156 = arith.addf %153, %155 : vector<16x32xf32>
    %157 = arith.addf %128, %156 : vector<16x32xf32>
    %158 = vector.extract_strided_slice %37 {offsets = [4, 0], sizes = [1, 32], strides = [1, 1]} : vector<6x32xf32> to vector<1x32xf32>
    %159 = vector.extract_strided_slice %37 {offsets = [5, 0], sizes = [1, 32], strides = [1, 1]} : vector<6x32xf32> to vector<1x32xf32>
    %cst_64 = arith.constant dense<0.000000e+00> : vector<16xf32>
    %160 = vector.multi_reduction <add>, %157, %cst_64 [1] : vector<16x32xf32> to vector<16xf32>
    %161 = vector.shape_cast %160 : vector<16xf32> to vector<16x1xf32>
    %cst_65 = arith.constant 3.200000e+01 : f32
    %162 = vector.broadcast %cst_65 : f32 to vector<16x1xf32>
    %163 = arith.divf %161, %162 : vector<16x1xf32>
    %164 = vector.broadcast %163 : vector<16x1xf32> to vector<16x32xf32>
    %165 = arith.subf %157, %164 : vector<16x32xf32>
    %166 = arith.mulf %165, %165 : vector<16x32xf32>
    %cst_66 = arith.constant dense<0.000000e+00> : vector<16xf32>
    %167 = vector.multi_reduction <add>, %166, %cst_66 [1] : vector<16x32xf32> to vector<16xf32>
    %168 = vector.shape_cast %167 : vector<16xf32> to vector<16x1xf32>
    %cst_67 = arith.constant 3.200000e+01 : f32
    %169 = vector.broadcast %cst_67 : f32 to vector<16x1xf32>
    %170 = arith.divf %168, %169 : vector<16x1xf32>
    %171 = vector.broadcast %163 : vector<16x1xf32> to vector<16x32xf32>
    %172 = arith.subf %157, %171 : vector<16x32xf32>
    %cst_68 = arith.constant 9.99999996E-13 : f32
    %173 = vector.broadcast %cst_68 : f32 to vector<16x1xf32>
    %174 = arith.addf %170, %173 : vector<16x1xf32>
    %175 = math.rsqrt %174 : vector<16x1xf32>
    %176 = vector.broadcast %175 : vector<16x1xf32> to vector<16x32xf32>
    %177 = arith.mulf %172, %176 : vector<16x32xf32>
    %178 = vector.broadcast %158 : vector<1x32xf32> to vector<16x32xf32>
    %179 = arith.mulf %177, %178 : vector<16x32xf32>
    %180 = vector.broadcast %159 : vector<1x32xf32> to vector<16x32xf32>
    %181 = arith.addf %179, %180 : vector<16x32xf32>
    %c1_69 = arith.constant 1 : index
    %c0_70 = arith.constant 0 : index
    %c0_71 = arith.constant 0 : index
    %182 = vector.load %arg8[%c1_69, %c0_70, %c0_71] : memref<2x6x32xf32, #tpu.memory_space<vmem>>, vector<1x6x32xf32>
    %183 = vector.shape_cast %182 : vector<1x6x32xf32> to vector<6x32xf32>
    %184 = arith.truncf %181 : vector<16x32xf32> to vector<16x32xbf16>
    %c1_72 = arith.constant 1 : index
    %c0_73 = arith.constant 0 : index
    %c0_74 = arith.constant 0 : index
    %185 = vector.load %arg5[%c1_72, %c0_73, %c0_74] : memref<2x32x96xbf16, #tpu.memory_space<vmem>>, vector<1x32x96xbf16>
    %186 = vector.shape_cast %185 : vector<1x32x96xbf16> to vector<32x96xbf16>
    %cst_75 = arith.constant dense<0.000000e+00> : vector<16x96xf32>
    %187 = tpu.matmul %184, %186, %cst_75 {dimension_numbers = #tpu.dot_dimension_numbers<[1], [0], [0], [1], [0, 0, 1, 1], [], []>} : vector<16x32xbf16>, vector<32x96xbf16>, vector<16x96xf32> -> vector<16x96xf32>
    %c1_76 = arith.constant 1 : index
    %c0_77 = arith.constant 0 : index
    %c0_78 = arith.constant 0 : index
    %188 = vector.load %arg6[%c1_76, %c0_77, %c0_78] : memref<2x1x96xf32, #tpu.memory_space<vmem>>, vector<1x1x96xf32>
    %189 = vector.shape_cast %188 : vector<1x1x96xf32> to vector<1x96xf32>
    %190 = vector.broadcast %189 : vector<1x96xf32> to vector<16x96xf32>
    %191 = arith.addf %187, %190 : vector<16x96xf32>
    %cst_79 = arith.constant 0.000000e+00 : f32
    %192 = vector.broadcast %cst_79 : f32 to vector<16x32xf32>
    %193 = vector.extract_strided_slice %191 {offsets = [0, 0], sizes = [16, 16], strides = [1, 1]} : vector<16x96xf32> to vector<16x16xf32>
    %194 = arith.truncf %193 : vector<16x16xf32> to vector<16x16xbf16>
    %195 = vector.extract_strided_slice %191 {offsets = [0, 32], sizes = [16, 16], strides = [1, 1]} : vector<16x96xf32> to vector<16x16xf32>
    %196 = arith.truncf %195 : vector<16x16xf32> to vector<16x16xbf16>
    %197 = vector.extract_strided_slice %191 {offsets = [0, 64], sizes = [16, 16], strides = [1, 1]} : vector<16x96xf32> to vector<16x16xf32>
    %198 = arith.truncf %197 : vector<16x16xf32> to vector<16x16xbf16>
    %cst_80 = arith.constant dense<0.000000e+00> : vector<16x16xf32>
    %199 = tpu.matmul %194, %196, %cst_80 {dimension_numbers = #tpu.dot_dimension_numbers<[1], [1], [0], [0], [0, 0, 1, 0], [], []>} : vector<16x16xbf16>, vector<16x16xbf16>, vector<16x16xf32> -> vector<16x16xf32>
    %cst_81 = arith.constant 2.500000e-01 : f32
    %200 = vector.broadcast %cst_81 : f32 to vector<16x16xf32>
    %201 = arith.mulf %199, %200 : vector<16x16xf32>
    %202 = arith.addf %201, %35 : vector<16x16xf32>
    %cst_82 = arith.constant dense<0xFF800000> : vector<16xf32>
    %203 = vector.multi_reduction <maximumf>, %202, %cst_82 [1] : vector<16x16xf32> to vector<16xf32>
    %204 = vector.shape_cast %203 : vector<16xf32> to vector<16x1xf32>
    %205 = vector.broadcast %204 : vector<16x1xf32> to vector<16x16xf32>
    %206 = arith.subf %202, %205 : vector<16x16xf32>
    %207 = math.exp %206 : vector<16x16xf32>
    %cst_83 = arith.constant dense<0.000000e+00> : vector<16xf32>
    %208 = vector.multi_reduction <add>, %207, %cst_83 [1] : vector<16x16xf32> to vector<16xf32>
    %209 = vector.shape_cast %208 : vector<16xf32> to vector<16x1xf32>
    %210 = tpu.reciprocal %209 {approx = true} : vector<16x1xf32> -> vector<16x1xf32>
    %211 = vector.broadcast %210 : vector<16x1xf32> to vector<16x16xf32>
    %212 = arith.mulf %207, %211 : vector<16x16xf32>
    %213 = arith.truncf %212 : vector<16x16xf32> to vector<16x16xbf16>
    %cst_84 = arith.constant dense<0.000000e+00> : vector<16x16xf32>
    %214 = tpu.matmul %213, %198, %cst_84 {dimension_numbers = #tpu.dot_dimension_numbers<[1], [0], [0], [1], [0, 0, 1, 1], [], []>} : vector<16x16xbf16>, vector<16x16xbf16>, vector<16x16xf32> -> vector<16x16xf32>
    %215 = arith.truncf %214 : vector<16x16xf32> to vector<16x16xbf16>
    %c2 = arith.constant 2 : index
    %c0_85 = arith.constant 0 : index
    %c0_86 = arith.constant 0 : index
    %216 = vector.load %arg7[%c2, %c0_85, %c0_86] : memref<4x16x32xbf16, #tpu.memory_space<vmem>>, vector<1x16x32xbf16>
    %217 = vector.shape_cast %216 : vector<1x16x32xbf16> to vector<16x32xbf16>
    %cst_87 = arith.constant dense<0.000000e+00> : vector<16x32xf32>
    %218 = tpu.matmul %215, %217, %cst_87 {dimension_numbers = #tpu.dot_dimension_numbers<[1], [0], [0], [1], [0, 0, 1, 1], [], []>} : vector<16x16xbf16>, vector<16x32xbf16>, vector<16x32xf32> -> vector<16x32xf32>
    %219 = arith.addf %192, %218 : vector<16x32xf32>
    %220 = vector.extract_strided_slice %191 {offsets = [0, 16], sizes = [16, 16], strides = [1, 1]} : vector<16x96xf32> to vector<16x16xf32>
    %221 = arith.truncf %220 : vector<16x16xf32> to vector<16x16xbf16>
    %222 = vector.extract_strided_slice %191 {offsets = [0, 48], sizes = [16, 16], strides = [1, 1]} : vector<16x96xf32> to vector<16x16xf32>
    %223 = arith.truncf %222 : vector<16x16xf32> to vector<16x16xbf16>
    %224 = vector.extract_strided_slice %191 {offsets = [0, 80], sizes = [16, 16], strides = [1, 1]} : vector<16x96xf32> to vector<16x16xf32>
    %225 = arith.truncf %224 : vector<16x16xf32> to vector<16x16xbf16>
    %cst_88 = arith.constant dense<0.000000e+00> : vector<16x16xf32>
    %226 = tpu.matmul %221, %223, %cst_88 {dimension_numbers = #tpu.dot_dimension_numbers<[1], [1], [0], [0], [0, 0, 1, 0], [], []>} : vector<16x16xbf16>, vector<16x16xbf16>, vector<16x16xf32> -> vector<16x16xf32>
    %cst_89 = arith.constant 2.500000e-01 : f32
    %227 = vector.broadcast %cst_89 : f32 to vector<16x16xf32>
    %228 = arith.mulf %226, %227 : vector<16x16xf32>
    %229 = arith.addf %228, %35 : vector<16x16xf32>
    %cst_90 = arith.constant dense<0xFF800000> : vector<16xf32>
    %230 = vector.multi_reduction <maximumf>, %229, %cst_90 [1] : vector<16x16xf32> to vector<16xf32>
    %231 = vector.shape_cast %230 : vector<16xf32> to vector<16x1xf32>
    %232 = vector.broadcast %231 : vector<16x1xf32> to vector<16x16xf32>
    %233 = arith.subf %229, %232 : vector<16x16xf32>
    %234 = math.exp %233 : vector<16x16xf32>
    %cst_91 = arith.constant dense<0.000000e+00> : vector<16xf32>
    %235 = vector.multi_reduction <add>, %234, %cst_91 [1] : vector<16x16xf32> to vector<16xf32>
    %236 = vector.shape_cast %235 : vector<16xf32> to vector<16x1xf32>
    %237 = tpu.reciprocal %236 {approx = true} : vector<16x1xf32> -> vector<16x1xf32>
    %238 = vector.broadcast %237 : vector<16x1xf32> to vector<16x16xf32>
    %239 = arith.mulf %234, %238 : vector<16x16xf32>
    %240 = arith.truncf %239 : vector<16x16xf32> to vector<16x16xbf16>
    %cst_92 = arith.constant dense<0.000000e+00> : vector<16x16xf32>
    %241 = tpu.matmul %240, %225, %cst_92 {dimension_numbers = #tpu.dot_dimension_numbers<[1], [0], [0], [1], [0, 0, 1, 1], [], []>} : vector<16x16xbf16>, vector<16x16xbf16>, vector<16x16xf32> -> vector<16x16xf32>
    %242 = arith.truncf %241 : vector<16x16xf32> to vector<16x16xbf16>
    %c3 = arith.constant 3 : index
    %c0_93 = arith.constant 0 : index
    %c0_94 = arith.constant 0 : index
    %243 = vector.load %arg7[%c3, %c0_93, %c0_94] : memref<4x16x32xbf16, #tpu.memory_space<vmem>>, vector<1x16x32xbf16>
    %244 = vector.shape_cast %243 : vector<1x16x32xbf16> to vector<16x32xbf16>
    %cst_95 = arith.constant dense<0.000000e+00> : vector<16x32xf32>
    %245 = tpu.matmul %242, %244, %cst_95 {dimension_numbers = #tpu.dot_dimension_numbers<[1], [0], [0], [1], [0, 0, 1, 1], [], []>} : vector<16x16xbf16>, vector<16x32xbf16>, vector<16x32xf32> -> vector<16x32xf32>
    %246 = arith.addf %219, %245 : vector<16x32xf32>
    %247 = vector.extract_strided_slice %183 {offsets = [0, 0], sizes = [1, 32], strides = [1, 1]} : vector<6x32xf32> to vector<1x32xf32>
    %248 = vector.broadcast %247 : vector<1x32xf32> to vector<16x32xf32>
    %249 = arith.addf %246, %248 : vector<16x32xf32>
    %250 = arith.addf %181, %249 : vector<16x32xf32>
    %251 = vector.extract_strided_slice %183 {offsets = [1, 0], sizes = [1, 32], strides = [1, 1]} : vector<6x32xf32> to vector<1x32xf32>
    %252 = vector.extract_strided_slice %183 {offsets = [2, 0], sizes = [1, 32], strides = [1, 1]} : vector<6x32xf32> to vector<1x32xf32>
    %cst_96 = arith.constant dense<0.000000e+00> : vector<16xf32>
    %253 = vector.multi_reduction <add>, %250, %cst_96 [1] : vector<16x32xf32> to vector<16xf32>
    %254 = vector.shape_cast %253 : vector<16xf32> to vector<16x1xf32>
    %cst_97 = arith.constant 3.200000e+01 : f32
    %255 = vector.broadcast %cst_97 : f32 to vector<16x1xf32>
    %256 = arith.divf %254, %255 : vector<16x1xf32>
    %257 = vector.broadcast %256 : vector<16x1xf32> to vector<16x32xf32>
    %258 = arith.subf %250, %257 : vector<16x32xf32>
    %259 = arith.mulf %258, %258 : vector<16x32xf32>
    %cst_98 = arith.constant dense<0.000000e+00> : vector<16xf32>
    %260 = vector.multi_reduction <add>, %259, %cst_98 [1] : vector<16x32xf32> to vector<16xf32>
    %261 = vector.shape_cast %260 : vector<16xf32> to vector<16x1xf32>
    %cst_99 = arith.constant 3.200000e+01 : f32
    %262 = vector.broadcast %cst_99 : f32 to vector<16x1xf32>
    %263 = arith.divf %261, %262 : vector<16x1xf32>
    %264 = vector.broadcast %256 : vector<16x1xf32> to vector<16x32xf32>
    %265 = arith.subf %250, %264 : vector<16x32xf32>
    %cst_100 = arith.constant 9.99999996E-13 : f32
    %266 = vector.broadcast %cst_100 : f32 to vector<16x1xf32>
    %267 = arith.addf %263, %266 : vector<16x1xf32>
    %268 = math.rsqrt %267 : vector<16x1xf32>
    %269 = vector.broadcast %268 : vector<16x1xf32> to vector<16x32xf32>
    %270 = arith.mulf %265, %269 : vector<16x32xf32>
    %271 = vector.broadcast %251 : vector<1x32xf32> to vector<16x32xf32>
    %272 = arith.mulf %270, %271 : vector<16x32xf32>
    %273 = vector.broadcast %252 : vector<1x32xf32> to vector<16x32xf32>
    %274 = arith.addf %272, %273 : vector<16x32xf32>
    %275 = arith.truncf %274 : vector<16x32xf32> to vector<16x32xbf16>
    %c1_101 = arith.constant 1 : index
    %c0_102 = arith.constant 0 : index
    %c0_103 = arith.constant 0 : index
    %276 = vector.load %arg9[%c1_101, %c0_102, %c0_103] : memref<2x32x128xbf16, #tpu.memory_space<vmem>>, vector<1x32x128xbf16>
    %277 = vector.shape_cast %276 : vector<1x32x128xbf16> to vector<32x128xbf16>
    %cst_104 = arith.constant dense<0.000000e+00> : vector<16x128xf32>
    %278 = tpu.matmul %275, %277, %cst_104 {dimension_numbers = #tpu.dot_dimension_numbers<[1], [0], [0], [1], [0, 0, 1, 1], [], []>} : vector<16x32xbf16>, vector<32x128xbf16>, vector<16x128xf32> -> vector<16x128xf32>
    %c1_105 = arith.constant 1 : index
    %c0_106 = arith.constant 0 : index
    %c0_107 = arith.constant 0 : index
    %279 = vector.load %arg10[%c1_105, %c0_106, %c0_107] : memref<2x1x128xf32, #tpu.memory_space<vmem>>, vector<1x1x128xf32>
    %280 = vector.shape_cast %279 : vector<1x1x128xf32> to vector<1x128xf32>
    %281 = vector.broadcast %280 : vector<1x128xf32> to vector<16x128xf32>
    %282 = arith.addf %278, %281 : vector<16x128xf32>
    %cst_108 = arith.constant 5.000000e-01 : f32
    %283 = vector.broadcast %cst_108 : f32 to vector<16x128xf32>
    %284 = arith.mulf %283, %282 : vector<16x128xf32>
    %cst_109 = arith.constant 4.471500e-02 : f32
    %285 = vector.broadcast %cst_109 : f32 to vector<16x128xf32>
    %286 = arith.mulf %285, %282 : vector<16x128xf32>
    %287 = arith.mulf %286, %282 : vector<16x128xf32>
    %288 = arith.mulf %287, %282 : vector<16x128xf32>
    %289 = arith.addf %282, %288 : vector<16x128xf32>
    %cst_110 = arith.constant 0.797884583 : f32
    %290 = vector.broadcast %cst_110 : f32 to vector<16x128xf32>
    %291 = arith.mulf %290, %289 : vector<16x128xf32>
    %292 = math.tanh %291 : vector<16x128xf32>
    %cst_111 = arith.constant 1.000000e+00 : f32
    %293 = vector.broadcast %cst_111 : f32 to vector<16x128xf32>
    %294 = arith.addf %293, %292 : vector<16x128xf32>
    %295 = arith.mulf %284, %294 : vector<16x128xf32>
    %296 = arith.truncf %295 : vector<16x128xf32> to vector<16x128xbf16>
    %c1_112 = arith.constant 1 : index
    %c0_113 = arith.constant 0 : index
    %c0_114 = arith.constant 0 : index
    %297 = vector.load %arg11[%c1_112, %c0_113, %c0_114] : memref<2x128x32xbf16, #tpu.memory_space<vmem>>, vector<1x128x32xbf16>
    %298 = vector.shape_cast %297 : vector<1x128x32xbf16> to vector<128x32xbf16>
    %cst_115 = arith.constant dense<0.000000e+00> : vector<16x32xf32>
    %299 = tpu.matmul %296, %298, %cst_115 {dimension_numbers = #tpu.dot_dimension_numbers<[1], [0], [0], [1], [0, 0, 1, 1], [], []>} : vector<16x128xbf16>, vector<128x32xbf16>, vector<16x32xf32> -> vector<16x32xf32>
    %300 = vector.extract_strided_slice %183 {offsets = [3, 0], sizes = [1, 32], strides = [1, 1]} : vector<6x32xf32> to vector<1x32xf32>
    %301 = vector.broadcast %300 : vector<1x32xf32> to vector<16x32xf32>
    %302 = arith.addf %299, %301 : vector<16x32xf32>
    %303 = arith.addf %274, %302 : vector<16x32xf32>
    %304 = vector.extract_strided_slice %183 {offsets = [4, 0], sizes = [1, 32], strides = [1, 1]} : vector<6x32xf32> to vector<1x32xf32>
    %305 = vector.extract_strided_slice %183 {offsets = [5, 0], sizes = [1, 32], strides = [1, 1]} : vector<6x32xf32> to vector<1x32xf32>
    %cst_116 = arith.constant dense<0.000000e+00> : vector<16xf32>
    %306 = vector.multi_reduction <add>, %303, %cst_116 [1] : vector<16x32xf32> to vector<16xf32>
    %307 = vector.shape_cast %306 : vector<16xf32> to vector<16x1xf32>
    %cst_117 = arith.constant 3.200000e+01 : f32
    %308 = vector.broadcast %cst_117 : f32 to vector<16x1xf32>
    %309 = arith.divf %307, %308 : vector<16x1xf32>
    %310 = vector.broadcast %309 : vector<16x1xf32> to vector<16x32xf32>
    %311 = arith.subf %303, %310 : vector<16x32xf32>
    %312 = arith.mulf %311, %311 : vector<16x32xf32>
    %cst_118 = arith.constant dense<0.000000e+00> : vector<16xf32>
    %313 = vector.multi_reduction <add>, %312, %cst_118 [1] : vector<16x32xf32> to vector<16xf32>
    %314 = vector.shape_cast %313 : vector<16xf32> to vector<16x1xf32>
    %cst_119 = arith.constant 3.200000e+01 : f32
    %315 = vector.broadcast %cst_119 : f32 to vector<16x1xf32>
    %316 = arith.divf %314, %315 : vector<16x1xf32>
    %317 = vector.broadcast %309 : vector<16x1xf32> to vector<16x32xf32>
    %318 = arith.subf %303, %317 : vector<16x32xf32>
    %cst_120 = arith.constant 9.99999996E-13 : f32
    %319 = vector.broadcast %cst_120 : f32 to vector<16x1xf32>
    %320 = arith.addf %316, %319 : vector<16x1xf32>
    %321 = math.rsqrt %320 : vector<16x1xf32>
    %322 = vector.broadcast %321 : vector<16x1xf32> to vector<16x32xf32>
    %323 = arith.mulf %318, %322 : vector<16x32xf32>
    %324 = vector.broadcast %304 : vector<1x32xf32> to vector<16x32xf32>
    %325 = arith.mulf %323, %324 : vector<16x32xf32>
    %326 = vector.broadcast %305 : vector<1x32xf32> to vector<16x32xf32>
    %327 = arith.addf %325, %326 : vector<16x32xf32>
    %328 = arith.truncf %327 : vector<16x32xf32> to vector<16x32xbf16>
    %c0_121 = arith.constant 0 : index
    %c0_122 = arith.constant 0 : index
    %c0_123 = arith.constant 0 : index
    %329 = vector.load %arg12[%c0_121, %c0_122, %c0_123] : memref<3x32x32xbf16, #tpu.memory_space<vmem>>, vector<1x32x32xbf16>
    %330 = vector.shape_cast %329 : vector<1x32x32xbf16> to vector<32x32xbf16>
    %cst_124 = arith.constant dense<0.000000e+00> : vector<16x32xf32>
    %331 = tpu.matmul %328, %330, %cst_124 {dimension_numbers = #tpu.dot_dimension_numbers<[1], [0], [0], [1], [0, 0, 1, 1], [], []>} : vector<16x32xbf16>, vector<32x32xbf16>, vector<16x32xf32> -> vector<16x32xf32>
    %c0_125 = arith.constant 0 : index
    %c0_126 = arith.constant 0 : index
    %332 = vector.load %arg13[%c0_125, %c0_126] : memref<3x32xf32, #tpu.memory_space<vmem>>, vector<1x32xf32>
    %333 = vector.broadcast %332 : vector<1x32xf32> to vector<16x32xf32>
    %334 = arith.addf %331, %333 : vector<16x32xf32>
    %cst_127 = arith.constant 0.000000e+00 : f32
    %335 = vector.broadcast %cst_127 : f32 to vector<16x32xf32>
    %336 = arith.maximumf %334, %335 : vector<16x32xf32>
    %337 = arith.truncf %336 : vector<16x32xf32> to vector<16x32xbf16>
    %c1_128 = arith.constant 1 : index
    %c0_129 = arith.constant 0 : index
    %c0_130 = arith.constant 0 : index
    %338 = vector.load %arg12[%c1_128, %c0_129, %c0_130] : memref<3x32x32xbf16, #tpu.memory_space<vmem>>, vector<1x32x32xbf16>
    %339 = vector.shape_cast %338 : vector<1x32x32xbf16> to vector<32x32xbf16>
    %cst_131 = arith.constant dense<0.000000e+00> : vector<16x32xf32>
    %340 = tpu.matmul %337, %339, %cst_131 {dimension_numbers = #tpu.dot_dimension_numbers<[1], [0], [0], [1], [0, 0, 1, 1], [], []>} : vector<16x32xbf16>, vector<32x32xbf16>, vector<16x32xf32> -> vector<16x32xf32>
    %c1_132 = arith.constant 1 : index
    %c0_133 = arith.constant 0 : index
    %341 = vector.load %arg13[%c1_132, %c0_133] : memref<3x32xf32, #tpu.memory_space<vmem>>, vector<1x32xf32>
    %342 = vector.broadcast %341 : vector<1x32xf32> to vector<16x32xf32>
    %343 = arith.addf %340, %342 : vector<16x32xf32>
    %cst_134 = arith.constant 0.000000e+00 : f32
    %344 = vector.broadcast %cst_134 : f32 to vector<16x32xf32>
    %345 = arith.maximumf %343, %344 : vector<16x32xf32>
    %346 = arith.truncf %345 : vector<16x32xf32> to vector<16x32xbf16>
    %c2_135 = arith.constant 2 : index
    %c0_136 = arith.constant 0 : index
    %c0_137 = arith.constant 0 : index
    %347 = vector.load %arg12[%c2_135, %c0_136, %c0_137] : memref<3x32x32xbf16, #tpu.memory_space<vmem>>, vector<1x32x32xbf16>
    %348 = vector.shape_cast %347 : vector<1x32x32xbf16> to vector<32x32xbf16>
    %cst_138 = arith.constant dense<0.000000e+00> : vector<16x32xf32>
    %349 = tpu.matmul %346, %348, %cst_138 {dimension_numbers = #tpu.dot_dimension_numbers<[1], [0], [0], [1], [0, 0, 1, 1], [], []>} : vector<16x32xbf16>, vector<32x32xbf16>, vector<16x32xf32> -> vector<16x32xf32>
    %c2_139 = arith.constant 2 : index
    %c0_140 = arith.constant 0 : index
    %350 = vector.load %arg13[%c2_139, %c0_140] : memref<3x32xf32, #tpu.memory_space<vmem>>, vector<1x32xf32>
    %351 = vector.broadcast %350 : vector<1x32xf32> to vector<16x32xf32>
    %352 = arith.addf %349, %351 : vector<16x32xf32>
    %cst_141 = arith.constant 0.000000e+00 : f32
    %353 = vector.broadcast %cst_141 : f32 to vector<16x32xf32>
    %354 = arith.maximumf %352, %353 : vector<16x32xf32>
    %355 = vector.extract_strided_slice %354 {offsets = [0, 0], sizes = [1, 32], strides = [1, 1]} : vector<16x32xf32> to vector<1x32xf32>
    %356 = vector.extract_strided_slice %354 {offsets = [8, 0], sizes = [1, 32], strides = [1, 1]} : vector<16x32xf32> to vector<1x32xf32>
    %357 = tpu.concatenate %355, %356 in 0 : vector<1x32xf32>, vector<1x32xf32> -> vector<2x32xf32>
    %358 = arith.truncf %357 : vector<2x32xf32> to vector<2x32xbf16>
    %c0_142 = arith.constant 0 : index
    %c0_143 = arith.constant 0 : index
    %359 = vector.load %arg14[%c0_142, %c0_143] : memref<32x128xbf16, #tpu.memory_space<vmem>>, vector<32x128xbf16>
    %cst_144 = arith.constant dense<0.000000e+00> : vector<2x128xf32>
    %360 = tpu.matmul %358, %359, %cst_144 {dimension_numbers = #tpu.dot_dimension_numbers<[1], [0], [0], [1], [0, 0, 1, 1], [], []>} : vector<2x32xbf16>, vector<32x128xbf16>, vector<2x128xf32> -> vector<2x128xf32>
    %c0_145 = arith.constant 0 : index
    %c0_146 = arith.constant 0 : index
    %361 = vector.load %arg15[%c0_145, %c0_146] : memref<1x128xf32, #tpu.memory_space<vmem>>, vector<1x128xf32>
    %362 = vector.broadcast %361 : vector<1x128xf32> to vector<2x128xf32>
    %363 = arith.addf %360, %362 : vector<2x128xf32>
    %cst_147 = arith.constant dense<0xFF800000> : vector<2xf32>
    %364 = vector.multi_reduction <maximumf>, %363, %cst_147 [1] : vector<2x128xf32> to vector<2xf32>
    %365 = vector.shape_cast %364 : vector<2xf32> to vector<2x1xf32>
    %366 = vector.broadcast %365 : vector<2x1xf32> to vector<2x128xf32>
    %367 = arith.subf %363, %366 : vector<2x128xf32>
    %368 = math.exp %367 : vector<2x128xf32>
    %cst_148 = arith.constant dense<0.000000e+00> : vector<2xf32>
    %369 = vector.multi_reduction <add>, %368, %cst_148 [1] : vector<2x128xf32> to vector<2xf32>
    %370 = vector.shape_cast %369 : vector<2xf32> to vector<2x1xf32>
    %371 = vector.broadcast %370 : vector<2x1xf32> to vector<2x128xf32>
    %372 = arith.divf %368, %371 : vector<2x128xf32>
    %c0_149 = arith.constant 0 : index
    %c0_150 = arith.constant 0 : index
    %373 = vector.load %arg16[%c0_149, %c0_150] : memref<2x128xf32, #tpu.memory_space<vmem>>, vector<2x128xf32>
    tpu.vector_store %arg16[%c0_149, %c0_150], %372 {strides = array<i32>} : memref<2x128xf32, #tpu.memory_space<vmem>>, vector<2x128xf32>,
    return
  }
}

</mosaic_0001>

<llo_original>
// kernel: tpu_custom_call.1
$region0: #{tpu_custom_call.1}
  #allocation0 [shape = 'u32[]', space=smem, size = 0x4, offset = 0x4, fixed_abs, tag = 'smem constant byte address 0x4 - core index']
  #allocation1 [shape = 'u32[144,128]{1,0:T(1,128)}', space=vmem, size = 0x12000, scoped, tag = 'internal scratch']
  %s0 = inlined_call_operand.vmem [shape: s32[16,1], index: 0, kind: input, shape index: {}]
  %s1 = inlined_call_operand.vmem [shape: f32[16,16], index: 1, kind: input, shape index: {}]
  %s2 = inlined_call_operand.vmem [shape: bf16[128,32], index: 2, kind: input, shape index: {}]
  %s3 = inlined_call_operand.vmem [shape: f32[16,32], index: 3, kind: input, shape index: {}]
  %s4 = inlined_call_operand.vmem [shape: f32[2,32], index: 4, kind: input, shape index: {}]
  %s5 = inlined_call_operand.vmem [shape: bf16[2,32,96], index: 5, kind: input, shape index: {}]
  %s6 = inlined_call_operand.vmem [shape: f32[2,1,96], index: 6, kind: input, shape index: {}]
  %s7 = inlined_call_operand.vmem [shape: bf16[4,16,32], index: 7, kind: input, shape index: {}]
  %s8 = inlined_call_operand.vmem [shape: f32[2,6,32], index: 8, kind: input, shape index: {}]
  %s9 = inlined_call_operand.vmem [shape: bf16[2,32,128], index: 9, kind: input, shape index: {}]
  %s10 = inlined_call_operand.vmem [shape: f32[2,1,128], index: 10, kind: input, shape index: {}]
  %s11 = inlined_call_operand.vmem [shape: bf16[2,128,32], index: 11, kind: input, shape index: {}]
  %s12 = inlined_call_operand.vmem [shape: bf16[3,32,32], index: 12, kind: input, shape index: {}]
  %s13 = inlined_call_operand.vmem [shape: f32[3,32], index: 13, kind: input, shape index: {}]
  %s14 = inlined_call_operand.vmem [shape: bf16[32,128], index: 14, kind: input, shape index: {}]
  %s15 = inlined_call_operand.vmem [shape: f32[1,128], index: 15, kind: input, shape index: {}]
  %s16 = inlined_call_operand.hbm [shape: f32[2,128], index: 16, kind: output, shape index: {}]
  %s17 = sld [smem:[#allocation0]]
  $region74: #{tpu_custom_call.1} parent=0
    _
  %s19 = ssub.s32 1, %s17
  %s20 = scalar_select 0, %s19, %s17
  $region1: #{tpu_custom_call.1} parent=0
    #allocation2 [shape = 'u8[1024]{0}', space=vmem, size = 0x400, scoped, tag = 'output window, operand 0, single buffered']
    #allocation3 [shape = 's32[1]{0}', space=sflag, size = 0x4, scoped, tag = 'scoped memory for tpu_custom_call.1']
    %21 = vsyncpa [#allocation3], 0
    // Predicated region
    $region2: #{tpu_custom_call.1} parent=1 // pred_check
      _
    $region3: #{tpu_custom_call.1} parent=1 // pred_check_branch
      %23 = sbr.rel (0) target = $region5
    $region4: #{tpu_custom_call.1} parent=1 // pred_region
      _
    $region5: #{tpu_custom_call.1} parent=1 // pred_fallthru
      _
    // Predicated region
    $region6: #{tpu_custom_call.1} parent=1 // pred_check
      _
    $region7: #{tpu_custom_call.1} parent=1 // pred_check_branch
      %25 = sbr.rel (0) target = $region9
    $region8: #{tpu_custom_call.1} parent=1 // pred_region
      _
    $region9: #{tpu_custom_call.1} parent=1 // pred_fallthru
      _
    // Predicated region
    $region10: #{tpu_custom_call.1} parent=1 // pred_check
      _
    $region11: #{tpu_custom_call.1} parent=1 // pred_check_branch
      %27 = sbr.rel (0) target = $region13
    $region12: #{tpu_custom_call.1} parent=1 // pred_region
      _
    $region13: #{tpu_custom_call.1} parent=1 // pred_fallthru
      _
    // Predicated region
    $region14: #{tpu_custom_call.1} parent=1 // pred_check
      _
    $region15: #{tpu_custom_call.1} parent=1 // pred_check_branch
      %29 = sbr.rel (0) target = $region17
    $region16: #{tpu_custom_call.1} parent=1 // pred_region
      _
    $region17: #{tpu_custom_call.1} parent=1 // pred_fallthru
      _
    // Predicated region
    $region18: #{tpu_custom_call.1} parent=1 // pred_check
      _
    $region19: #{tpu_custom_call.1} parent=1 // pred_check_branch
      %31 = sbr.rel (0) target = $region21
    $region20: #{tpu_custom_call.1} parent=1 // pred_region
      _
    $region21: #{tpu_custom_call.1} parent=1 // pred_fallthru
      _
    // Predicated region
    $region22: #{tpu_custom_call.1} parent=1 // pred_check
      _
    $region23: #{tpu_custom_call.1} parent=1 // pred_check_branch
      %33 = sbr.rel (0) target = $region25
    $region24: #{tpu_custom_call.1} parent=1 // pred_region
      _
    $region25: #{tpu_custom_call.1} parent=1 // pred_fallthru
      _
    // Predicated region
    $region26: #{tpu_custom_call.1} parent=1 // pred_check
      _
    $region27: #{tpu_custom_call.1} parent=1 // pred_check_branch
      %35 = sbr.rel (0) target = $region29
    $region28: #{tpu_custom_call.1} parent=1 // pred_region
      _
    $region29: #{tpu_custom_call.1} parent=1 // pred_fallthru
      _
    // Predicated region
    $region30: #{tpu_custom_call.1} parent=1 // pred_check
      _
    $region31: #{tpu_custom_call.1} parent=1 // pred_check_branch
      %37 = sbr.rel (0) target = $region33
    $region32: #{tpu_custom_call.1} parent=1 // pred_region
      _
    $region33: #{tpu_custom_call.1} parent=1 // pred_fallthru
      _
    // Predicated region
    $region34: #{tpu_custom_call.1} parent=1 // pred_check
      _
    $region35: #{tpu_custom_call.1} parent=1 // pred_check_branch
      %39 = sbr.rel (0) target = $region37
    $region36: #{tpu_custom_call.1} parent=1 // pred_region
      _
    $region37: #{tpu_custom_call.1} parent=1 // pred_fallthru
      _
    // Predicated region
    $region38: #{tpu_custom_call.1} parent=1 // pred_check
      _
    $region39: #{tpu_custom_call.1} parent=1 // pred_check_branch
      %41 = sbr.rel (0) target = $region41
    $region40: #{tpu_custom_call.1} parent=1 // pred_region
      _
    $region41: #{tpu_custom_call.1} parent=1 // pred_fallthru
      _
    // Predicated region
    $region42: #{tpu_custom_call.1} parent=1 // pred_check
      _
    $region43: #{tpu_custom_call.1} parent=1 // pred_check_branch
      %43 = sbr.rel (0) target = $region45
    $region44: #{tpu_custom_call.1} parent=1 // pred_region
      _
    $region45: #{tpu_custom_call.1} parent=1 // pred_fallthru
      _
    // Predicated region
    $region46: #{tpu_custom_call.1} parent=1 // pred_check
      _
    $region47: #{tpu_custom_call.1} parent=1 // pred_check_branch
      %45 = sbr.rel (0) target = $region49
    $region48: #{tpu_custom_call.1} parent=1 // pred_region
      _
    $region49: #{tpu_custom_call.1} parent=1 // pred_fallthru
      _
    // Predicated region
    $region50: #{tpu_custom_call.1} parent=1 // pred_check
      _
    $region51: #{tpu_custom_call.1} parent=1 // pred_check_branch
      %47 = sbr.rel (0) target = $region53
    $region52: #{tpu_custom_call.1} parent=1 // pred_region
      _
    $region53: #{tpu_custom_call.1} parent=1 // pred_fallthru
      _
    // Predicated region
    $region54: #{tpu_custom_call.1} parent=1 // pred_check
      _
    $region55: #{tpu_custom_call.1} parent=1 // pred_check_branch
      %49 = sbr.rel (0) target = $region57
    $region56: #{tpu_custom_call.1} parent=1 // pred_region
      _
    $region57: #{tpu_custom_call.1} parent=1 // pred_fallthru
      _
    // Predicated region
    $region58: #{tpu_custom_call.1} parent=1 // pred_check
      _
    $region59: #{tpu_custom_call.1} parent=1 // pred_check_branch
      %51 = sbr.rel (0) target = $region61
    $region60: #{tpu_custom_call.1} parent=1 // pred_region
      _
    $region61: #{tpu_custom_call.1} parent=1 // pred_fallthru
      _
    // Predicated region
    $region62: #{tpu_custom_call.1} parent=1 // pred_check
      _
    $region63: #{tpu_custom_call.1} parent=1 // pred_check_branch
      %53 = sbr.rel (0) target = $region65
    $region64: #{tpu_custom_call.1} parent=1 // pred_region
      _
    $region65: #{tpu_custom_call.1} parent=1 // pred_fallthru
      _
    %v55 = vlaneseq
    %v56 = vand.u32 %v55, 127
    %v57 = vld [vmem:[%s0] sm:$0xff]
    %v58 = vld [vmem:[%s0 + $0x8] sm:$0xff]
    %59 = vset.pattern.permute.xlu0 0
    %60 = vperm.xlu0 %59, %v57
    %v61 = vpop.permute.xlu0 %60
    %62 = vset.pattern.permute.xlu0 0
    %63 = vperm.xlu0 %62, %v58
    %v64 = vpop.permute.xlu0 %63
    %vm65 = vcmp.eq.s32.totalorder %v56, %v61
    %vm66 = vcmp.eq.s32.totalorder %v56, %v64
    %v67 = vsel %vm65, 1, 0
    %v68 = vsel %vm66, 1, 0
    %v69 = vcvt.s32.f32 %v67
    %v70 = vcvt.s32.f32 %v68
    %v71 = vpack.c.bf16 %v70, %v69
    %v72 = vld [vmem:[%s2] sm:$0xf]
    %v73 = vld [vmem:[%s2 + $0x4] sm:$0xf]
    %v74 = vld [vmem:[%s2 + $0x8] sm:$0xf]
    %v75 = vld [vmem:[%s2 + $0xc] sm:$0xf]
    %v76 = vld [vmem:[%s2 + $0x10] sm:$0xf]
    %v77 = vld [vmem:[%s2 + $0x14] sm:$0xf]
    %v78 = vld [vmem:[%s2 + $0x18] sm:$0xf]
    %v79 = vld [vmem:[%s2 + $0x1c] sm:$0xf]
    %v80 = vld [vmem:[%s2 + $0x20] sm:$0xf]
    %v81 = vld [vmem:[%s2 + $0x24] sm:$0xf]
    %v82 = vld [vmem:[%s2 + $0x28] sm:$0xf]
    %v83 = vld [vmem:[%s2 + $0x2c] sm:$0xf]
    %v84 = vld [vmem:[%s2 + $0x30] sm:$0xf]
    %v85 = vld [vmem:[%s2 + $0x34] sm:$0xf]
    %v86 = vld [vmem:[%s2 + $0x38] sm:$0xf]
    %v87 = vld [vmem:[%s2 + $0x3c] sm:$0xf]
    %v88 = vld [vmem:[%s3] sm:$0xff]
    %v89 = vld [vmem:[%s3 + $0x8] sm:$0xff]
    %v106 = vunpack.c.l.b16 %v72
    %v107 = vunpack.c.l.b16 %v73
    %v108 = vunpack.c.l.b16 %v74
    %v109 = vunpack.c.l.b16 %v75
    %v110 = vunpack.c.l.b16 %v76
    %v111 = vunpack.c.l.b16 %v77
    %v112 = vunpack.c.l.b16 %v78
    %v113 = vunpack.c.l.b16 %v79
    %v114 = vunpack.c.l.b16 %v80
    %v115 = vunpack.c.l.b16 %v81
    %v116 = vunpack.c.l.b16 %v82
    %v117 = vunpack.c.l.b16 %v83
    %v118 = vunpack.c.l.b16 %v84
    %v119 = vunpack.c.l.b16 %v85
    %v120 = vunpack.c.l.b16 %v86
    %v121 = vunpack.c.l.b16 %v87
    %v122 = vpack.c.b16 %v107, %v106
    %v123 = vpack.c.b16 %v109, %v108
    %v124 = vpack.c.b16 %v111, %v110
    %v125 = vpack.c.b16 %v113, %v112
    %v126 = vpack.c.b16 %v115, %v114
    %v127 = vpack.c.b16 %v117, %v116
    %v128 = vpack.c.b16 %v119, %v118
    %v129 = vpack.c.b16 %v121, %v120
    %138 = vmatprep.subr.bf16.mxu0 0
    %139 = vmatpush1.bf16.msra.mxu0 %v122
    %140 = vmatprep.subr.bf16.mxu0 0
    %141 = vmatpush1.bf16.msra.mxu0 %v123
    %142 = vmatprep.subr.bf16.mxu0 0
    %143 = vmatpush1.bf16.msra.mxu0 %v124
    %144 = vmatprep.subr.bf16.mxu0 0
    %145 = vmatpush1.bf16.msra.mxu0 %v125
    %146 = vmatprep.subr.bf16.mxu0 0
    %147 = vmatpush1.bf16.msra.mxu0 %v126
    %148 = vmatprep.subr.bf16.mxu0 0
    %149 = vmatpush1.bf16.msra.mxu0 %v127
    %150 = vmatprep.subr.bf16.mxu0 0
    %151 = vmatpush1.bf16.msra.mxu0 %v128
    %152 = vmatprep.subr.bf16.mxu0 0
    %153 = vmatpush1.bf16.msra.mxu0 %v129
    %154 = vmatprep.subr.bf16.mxu0 0
    %155 = vmatpush1.bf16.msra.mxu0 0
    %156 = vmatprep.subr.bf16.mxu0 0
    %157 = vmatpush1.bf16.msra.mxu0 0
    %158 = vmatprep.subr.bf16.mxu0 0
    %159 = vmatpush1.bf16.msra.mxu0 0
    %160 = vmatprep.subr.bf16.mxu0 0
    %161 = vmatpush1.bf16.msra.mxu0 0
    %162 = vmatprep.subr.bf16.mxu0 0
    %163 = vmatpush1.bf16.msra.mxu0 0
    %164 = vmatprep.subr.bf16.mxu0 0
    %165 = vmatpush1.bf16.msra.mxu0 0
    %166 = vmatprep.subr.bf16.mxu0 0
    %167 = vmatpush1.bf16.msra.mxu0 0
    %168 = vmatprep.subr.bf16.mxu0 0
    %169 = vmatpush1.bf16.msra.mxu0 0
    %170 = vmatprep.mubr.bf16.mxu0 0
    %171 = vmatmul.mubr.bf16.gmra.mrb[0].mxu0 %v71
    %v172 = vpop.f32.mrb[0].mxu0
    %v173 = vadd.f32 %v88, %v172
    %v174 = vpop.f32.mrb[0].mxu0
    %v175 = vpop.f32.mrb[0].mxu0
    %v176 = vadd.f32 %v89, %v175
    %v177 = vpop.f32.mrb[0].mxu0
    %178 = vdwg.mxu0
    %v179 = vld [vmem:[%s4] sm:$0x1]
    %v180 = vld [vmem:[%s4 + $0x1] sm:$0x1]
    %vm181 = vcmask 261120
    %v182 = vsel %vm181, %v173, 0.0
    %183 = vadd.xlane.f32.xlu0 %v182
    %v184 = vpop.xlane.xlu0 %183
    %v185 = vsel %vm181, %v176, 0.0
    %186 = vadd.xlane.f32.xlu0 %v185
    %v187 = vpop.xlane.xlu0 %186
    %v188 = vrcp.pop 32.0
    %v189 = vmul.f32 %v184, %v188
    %v190 = vmul.f32 %v187, %v188
    %v191 = vsub.f32 %v173, %v189
    %v192 = vsub.f32 %v176, %v190
    %v193 = vmul.f32 %v191, %v191
    %v194 = vmul.f32 %v192, %v192
    %v195 = vsel %vm181, %v193, 0.0
    %196 = vadd.xlane.f32.xlu0 %v195
    %v197 = vpop.xlane.xlu0 %196
    %v198 = vsel %vm181, %v194, 0.0
    %199 = vadd.xlane.f32.xlu0 %v198
    %v200 = vpop.xlane.xlu0 %199
    %v201 = vmul.f32 %v197, %v188
    %v202 = vmul.f32 %v200, %v188
    %v203 = vadd.f32 %v201, 1e-12
    %v204 = vadd.f32 %v202, 1e-12
    %v205 = vrsqrt.pop %v203
    %v206 = vrsqrt.pop %v204
    %v207 = vmul.f32 %v191, %v205
    %v208 = vmul.f32 %v192, %v206
    %v209 = vlaneseq
    %v210 = vshrl.u32 %v209, 7
    %v211 = vsub.s32 0, %v210
    %v212 = vrot.slane %v179, %v211
    %v213 = vmul.f32 %v207, %v212
    %v214 = vmul.f32 %v208, %v212
    %v215 = vlaneseq
    %v216 = vshrl.u32 %v215, 7
    %v217 = vsub.s32 0, %v216
    %v218 = vrot.slane %v180, %v217
    %v219 = vadd.f32 %v213, %v218
    %v220 = vadd.f32 %v214, %v218
    %v221 = vld [vmem:[%s1] sm:$0xff]
    %v222 = vld [vmem:[%s1 + $0x8] sm:$0xff]
    %v223 = vld [vmem:[%s8] sm:$0x3f]
    %v224 = vpack.c.bf16 %v220, %v219
    %v225 = vld [vmem:[%s5] sm:$0xf]
    %v226 = vld [vmem:[%s5 + $0x4] sm:$0xf]
    %v227 = vld [vmem:[%s5 + $0x8] sm:$0xf]
    %v228 = vld [vmem:[%s5 + $0xc] sm:$0xf]
    %v229 = vld [vmem:[%s6] sm:$0x1]
    %v231 = vlaneseq
    %v232 = vshrl.u32 %v231, 7
    %v233 = vsub.s32 0, %v232
    %v234 = vrot.slane %v229, %v233
    %v240 = vunpack.c.l.b16 %v225
    %v241 = vunpack.c.l.b16 %v226
    %v242 = vunpack.c.l.b16 %v227
    %v243 = vunpack.c.l.b16 %v228
    %v244 = vpack.c.b16 %v241, %v240
    %v245 = vpack.c.b16 %v243, %v242
    %v249 = vsel %vm181, %v224, 0
    %251 = vmatprep.subr.bf16.mxu0 0
    %252 = vmatpush1.bf16.msra.mxu0 %v244
    %253 = vmatprep.subr.bf16.mxu0 0
    %254 = vmatpush1.bf16.msra.mxu0 %v245
    %255 = vmatprep.subr.bf16.mxu0 0
    %256 = vmatpush1.bf16.msra.mxu0 0
    %257 = vmatprep.subr.bf16.mxu0 0
    %258 = vmatpush1.bf16.msra.mxu0 0
    %259 = vmatprep.subr.bf16.mxu0 0
    %260 = vmatpush1.bf16.msra.mxu0 0
    %261 = vmatprep.subr.bf16.mxu0 0
    %262 = vmatpush1.bf16.msra.mxu0 0
    %263 = vmatprep.subr.bf16.mxu0 0
    %264 = vmatpush1.bf16.msra.mxu0 0
    %265 = vmatprep.subr.bf16.mxu0 0
    %266 = vmatpush1.bf16.msra.mxu0 0
    %267 = vmatprep.subr.bf16.mxu0 0
    %268 = vmatpush1.bf16.msra.mxu0 0
    %269 = vmatprep.subr.bf16.mxu0 0
    %270 = vmatpush1.bf16.msra.mxu0 0
    %271 = vmatprep.subr.bf16.mxu0 0
    %272 = vmatpush1.bf16.msra.mxu0 0
    %273 = vmatprep.subr.bf16.mxu0 0
    %274 = vmatpush1.bf16.msra.mxu0 0
    %275 = vmatprep.subr.bf16.mxu0 0
    %276 = vmatpush1.bf16.msra.mxu0 0
    %277 = vmatprep.subr.bf16.mxu0 0
    %278 = vmatpush1.bf16.msra.mxu0 0
    %279 = vmatprep.subr.bf16.mxu0 0
    %280 = vmatpush1.bf16.msra.mxu0 0
    %281 = vmatprep.subr.bf16.mxu0 0
    %282 = vmatpush1.bf16.msra.mxu0 0
    %283 = vmatprep.mubr.bf16.mxu0 0
    %284 = vmatmul.mubr.bf16.gmra.mrb[0].mxu0 %v249
    %v285 = vpop.f32.mrb[0].mxu0
    %v286 = vadd.f32 %v234, %v285
    %v287 = vpop.f32.mrb[0].mxu0
    %v288 = vpop.f32.mrb[0].mxu0
    %v289 = vadd.f32 %v234, %v288
    %v290 = vpop.f32.mrb[0].mxu0
    %291 = vdwg.mxu0
    %v292 = vpack.c.bf16 %v289, %v286
    %294 = vrot.lane.b32.xlu0 %v292, 96
    %v295 = vpop.permute.xlu0 %294
    %vm296 = vcmask 130048
    %v298 = vsel %vm296, %v292, 0
    %v301 = vsel %vm296, %v295, 0
    %303 = vmatprep.subr.bf16.mxu0 0
    %304 = vmatpush1.bf16.xpose.msra.mxu0 %v301
    %305 = vmatprep.subr.bf16.mxu0 0
    %306 = vmatpush1.bf16.xpose.msra.mxu0 0
    %307 = vmatprep.subr.bf16.mxu0 0
    %308 = vmatpush1.bf16.xpose.msra.mxu0 0
    %309 = vmatprep.subr.bf16.mxu0 0
    %310 = vmatpush1.bf16.xpose.msra.mxu0 0
    %311 = vmatprep.subr.bf16.mxu0 0
    %312 = vmatpush1.bf16.xpose.msra.mxu0 0
    %313 = vmatprep.subr.bf16.mxu0 0
    %314 = vmatpush1.bf16.xpose.msra.mxu0 0
    %315 = vmatprep.subr.bf16.mxu0 0
    %316 = vmatpush1.bf16.xpose.msra.mxu0 0
    %317 = vmatprep.subr.bf16.mxu0 0
    %318 = vmatpush1.bf16.xpose.msra.mxu0 0
    %319 = vmatprep.subr.bf16.mxu0 0
    %320 = vmatpush1.bf16.xpose.msra.mxu0 0
    %321 = vmatprep.subr.bf16.mxu0 0
    %322 = vmatpush1.bf16.xpose.msra.mxu0 0
    %323 = vmatprep.subr.bf16.mxu0 0
    %324 = vmatpush1.bf16.xpose.msra.mxu0 0
    %325 = vmatprep.subr.bf16.mxu0 0
    %326 = vmatpush1.bf16.xpose.msra.mxu0 0
    %327 = vmatprep.subr.bf16.mxu0 0
    %328 = vmatpush1.bf16.xpose.msra.mxu0 0
    %329 = vmatprep.subr.bf16.mxu0 0
    %330 = vmatpush1.bf16.xpose.msra.mxu0 0
    %331 = vmatprep.subr.bf16.mxu0 0
    %332 = vmatpush1.bf16.xpose.msra.mxu0 0
    %333 = vmatprep.subr.bf16.mxu0 0
    %334 = vmatpush1.bf16.xpose.msra.mxu0 0
    %335 = vmatprep.mubr.bf16.mxu0 0
    %336 = vmatmul.mubr.bf16.gmra.mrb[0].mxu0 %v298
    %v337 = vpop.f32.mrb[0].mxu0
    %v338 = vadd.f32 0.0, %v337
    %v339 = vpop.f32.mrb[0].mxu0
    %v340 = vpop.f32.mrb[0].mxu0
    %v341 = vadd.f32 0.0, %v340
    %v342 = vpop.f32.mrb[0].mxu0
    %343 = vdwg.mxu0
    %v344 = vmul.f32 %v338, 0.25
    %v345 = vmul.f32 %v341, 0.25
    %v346 = vadd.f32 %v344, %v221
    %v347 = vadd.f32 %v345, %v222
    %v348 = vsel %vm296, %v346, -inf
    %349 = vmax.xlane.f32.xlu0 %v348
    %v350 = vpop.xlane.xlu0 %349
    %v351 = vsel %vm296, %v347, -inf
    %352 = vmax.xlane.f32.xlu0 %v351
    %v353 = vpop.xlane.xlu0 %352
    %v354 = vsub.f32 %v346, %v350
    %v355 = vsub.f32 %v347, %v353
    %v356 = vmul.f32 %v354, 1.442695
    %v357 = vpow.pop %v356
    %v358 = vmul.f32 %v355, 1.442695
    %v359 = vpow.pop %v358
    %v360 = vsel %vm296, %v357, 0.0
    %361 = vadd.xlane.f32.xlu0 %v360
    %v362 = vpop.xlane.xlu0 %361
    %v363 = vsel %vm296, %v359, 0.0
    %364 = vadd.xlane.f32.xlu0 %v363
    %v365 = vpop.xlane.xlu0 %364
    %v366 = vrcp.pop %v362
    %v367 = vrcp.pop %v365
    %v368 = vmul.f32 %v357, %v366
    %v369 = vmul.f32 %v359, %v367
    %v370 = vpack.c.bf16 %v369, %v368
    %371 = vrot.lane.b32.xlu0 %v292, 64
    %v372 = vpop.permute.xlu0 %371
    %v375 = vsel %vm296, %v370, 0
    %377 = vmatprep.subr.bf16.mxu0 0
    %378 = vmatpush1.bf16.msra.mxu0 %v372
    %379 = vmatprep.subr.bf16.mxu0 0
    %380 = vmatpush1.bf16.msra.mxu0 0
    %381 = vmatprep.subr.bf16.mxu0 0
    %382 = vmatpush1.bf16.msra.mxu0 0
    %383 = vmatprep.subr.bf16.mxu0 0
    %384 = vmatpush1.bf16.msra.mxu0 0
    %385 = vmatprep.subr.bf16.mxu0 0
    %386 = vmatpush1.bf16.msra.mxu0 0
    %387 = vmatprep.subr.bf16.mxu0 0
    %388 = vmatpush1.bf16.msra.mxu0 0
    %389 = vmatprep.subr.bf16.mxu0 0
    %390 = vmatpush1.bf16.msra.mxu0 0
    %391 = vmatprep.subr.bf16.mxu0 0
    %392 = vmatpush1.bf16.msra.mxu0 0
    %393 = vmatprep.subr.bf16.mxu0 0
    %394 = vmatpush1.bf16.msra.mxu0 0
    %395 = vmatprep.subr.bf16.mxu0 0
    %396 = vmatpush1.bf16.msra.mxu0 0
    %397 = vmatprep.subr.bf16.mxu0 0
    %398 = vmatpush1.bf16.msra.mxu0 0
    %399 = vmatprep.subr.bf16.mxu0 0
    %400 = vmatpush1.bf16.msra.mxu0 0
    %401 = vmatprep.subr.bf16.mxu0 0
    %402 = vmatpush1.bf16.msra.mxu0 0
    %403 = vmatprep.subr.bf16.mxu0 0
    %404 = vmatpush1.bf16.msra.mxu0 0
    %405 = vmatprep.subr.bf16.mxu0 0
    %406 = vmatpush1.bf16.msra.mxu0 0
    %407 = vmatprep.subr.bf16.mxu0 0
    %408 = vmatpush1.bf16.msra.mxu0 0
    %409 = vmatprep.mubr.bf16.mxu0 0
    %410 = vmatmul.mubr.bf16.gmra.mrb[0].mxu0 %v375
    %v411 = vpop.f32.mrb[0].mxu0
    %v412 = vadd.f32 0.0, %v411
    %v413 = vpop.f32.mrb[0].mxu0
    %v414 = vpop.f32.mrb[0].mxu0
    %v415 = vadd.f32 0.0, %v414
    %v416 = vpop.f32.mrb[0].mxu0
    %417 = vdwg.mxu0
    %v418 = vpack.c.bf16 %v415, %v412
    %v419 = vld [vmem:[%s7] sm:$0xf]
    %v420 = vld [vmem:[%s7 + $0x4] sm:$0xf]
    %421 = vrot.lane.b32.xlu0 %v292, 112
    %v422 = vpop.permute.xlu0 %421
    %423 = vrot.lane.b32.xlu0 %v292, 80
    %v424 = vpop.permute.xlu0 %423
    %v426 = vsel %vm296, %v422, 0
    %v429 = vsel %vm296, %v424, 0
    %431 = vmatprep.subr.bf16.mxu0 0
    %432 = vmatpush1.bf16.xpose.msra.mxu0 %v429
    %433 = vmatprep.subr.bf16.mxu0 0
    %434 = vmatpush1.bf16.xpose.msra.mxu0 0
    %435 = vmatprep.subr.bf16.mxu0 0
    %436 = vmatpush1.bf16.xpose.msra.mxu0 0
    %437 = vmatprep.subr.bf16.mxu0 0
    %438 = vmatpush1.bf16.xpose.msra.mxu0 0
    %439 = vmatprep.subr.bf16.mxu0 0
    %440 = vmatpush1.bf16.xpose.msra.mxu0 0
    %441 = vmatprep.subr.bf16.mxu0 0
    %442 = vmatpush1.bf16.xpose.msra.mxu0 0
    %443 = vmatprep.subr.bf16.mxu0 0
    %444 = vmatpush1.bf16.xpose.msra.mxu0 0
    %445 = vmatprep.subr.bf16.mxu0 0
    %446 = vmatpush1.bf16.xpose.msra.mxu0 0
    %447 = vmatprep.subr.bf16.mxu0 0
    %448 = vmatpush1.bf16.xpose.msra.mxu0 0
    %449 = vmatprep.subr.bf16.mxu0 0
    %450 = vmatpush1.bf16.xpose.msra.mxu0 0
    %451 = vmatprep.subr.bf16.mxu0 0
    %452 = vmatpush1.bf16.xpose.msra.mxu0 0
    %453 = vmatprep.subr.bf16.mxu0 0
    %454 = vmatpush1.bf16.xpose.msra.mxu0 0
    %455 = vmatprep.subr.bf16.mxu0 0
    %456 = vmatpush1.bf16.xpose.msra.mxu0 0
    %457 = vmatprep.subr.bf16.mxu0 0
    %458 = vmatpush1.bf16.xpose.msra.mxu0 0
    %459 = vmatprep.subr.bf16.mxu0 0
    %460 = vmatpush1.bf16.xpose.msra.mxu0 0
    %461 = vmatprep.subr.bf16.mxu0 0
    %462 = vmatpush1.bf16.xpose.msra.mxu0 0
    %463 = vmatprep.mubr.bf16.mxu0 0
    %464 = vmatmul.mubr.bf16.gmra.mrb[0].mxu0 %v426
    %v465 = vpop.f32.mrb[0].mxu0
    %v466 = vadd.f32 0.0, %v465
    %v467 = vpop.f32.mrb[0].mxu0
    %v468 = vpop.f32.mrb[0].mxu0
    %v469 = vadd.f32 0.0, %v468
    %v470 = vpop.f32.mrb[0].mxu0
    %471 = vdwg.mxu0
    %v472 = vmul.f32 %v466, 0.25
    %v473 = vmul.f32 %v469, 0.25
    %v474 = vadd.f32 %v472, %v221
    %v475 = vadd.f32 %v473, %v222
    %v476 = vsel %vm296, %v474, -inf
    %477 = vmax.xlane.f32.xlu0 %v476
    %v478 = vpop.xlane.xlu0 %477
    %v479 = vsel %vm296, %v475, -inf
    %480 = vmax.xlane.f32.xlu0 %v479
    %v481 = vpop.xlane.xlu0 %480
    %v482 = vsub.f32 %v474, %v478
    %v483 = vsub.f32 %v475, %v481
    %v484 = vmul.f32 %v482, 1.442695
    %v485 = vpow.pop %v484
    %v486 = vmul.f32 %v483, 1.442695
    %v487 = vpow.pop %v486
    %v488 = vsel %vm296, %v485, 0.0
    %489 = vadd.xlane.f32.xlu0 %v488
    %v490 = vpop.xlane.xlu0 %489
    %v491 = vsel %vm296, %v487, 0.0
    %492 = vadd.xlane.f32.xlu0 %v491
    %v493 = vpop.xlane.xlu0 %492
    %v494 = vrcp.pop %v490
    %v495 = vrcp.pop %v493
    %v496 = vmul.f32 %v485, %v494
    %v497 = vmul.f32 %v487, %v495
    %v498 = vpack.c.bf16 %v497, %v496
    %499 = vrot.lane.b32.xlu0 %v292, 48
    %v500 = vpop.permute.xlu0 %499
    %v503 = vsel %vm296, %v498, 0
    %505 = vmatprep.subr.bf16.mxu0 0
    %506 = vmatpush1.bf16.msra.mxu0 %v500
    %507 = vmatprep.subr.bf16.mxu0 0
    %508 = vmatpush1.bf16.msra.mxu0 0
    %509 = vmatprep.subr.bf16.mxu0 0
    %510 = vmatpush1.bf16.msra.mxu0 0
    %511 = vmatprep.subr.bf16.mxu0 0
    %512 = vmatpush1.bf16.msra.mxu0 0
    %513 = vmatprep.subr.bf16.mxu0 0
    %514 = vmatpush1.bf16.msra.mxu0 0
    %515 = vmatprep.subr.bf16.mxu0 0
    %516 = vmatpush1.bf16.msra.mxu0 0
    %517 = vmatprep.subr.bf16.mxu0 0
    %518 = vmatpush1.bf16.msra.mxu0 0
    %519 = vmatprep.subr.bf16.mxu0 0
    %520 = vmatpush1.bf16.msra.mxu0 0
    %521 = vmatprep.subr.bf16.mxu0 0
    %522 = vmatpush1.bf16.msra.mxu0 0
    %523 = vmatprep.subr.bf16.mxu0 0
    %524 = vmatpush1.bf16.msra.mxu0 0
    %525 = vmatprep.subr.bf16.mxu0 0
    %526 = vmatpush1.bf16.msra.mxu0 0
    %527 = vmatprep.subr.bf16.mxu0 0
    %528 = vmatpush1.bf16.msra.mxu0 0
    %529 = vmatprep.subr.bf16.mxu0 0
    %530 = vmatpush1.bf16.msra.mxu0 0
    %531 = vmatprep.subr.bf16.mxu0 0
    %532 = vmatpush1.bf16.msra.mxu0 0
    %533 = vmatprep.subr.bf16.mxu0 0
    %534 = vmatpush1.bf16.msra.mxu0 0
    %535 = vmatprep.subr.bf16.mxu0 0
    %536 = vmatpush1.bf16.msra.mxu0 0
    %537 = vmatprep.mubr.bf16.mxu0 0
    %538 = vmatmul.mubr.bf16.gmra.mrb[0].mxu0 %v503
    %v539 = vpop.f32.mrb[0].mxu0
    %v540 = vadd.f32 0.0, %v539
    %v541 = vpop.f32.mrb[0].mxu0
    %v542 = vpop.f32.mrb[0].mxu0
    %v543 = vadd.f32 0.0, %v542
    %v544 = vpop.f32.mrb[0].mxu0
    %545 = vdwg.mxu0
    %v546 = vpack.c.bf16 %v543, %v540
    %s547 = scalar_lea.vmem %s7, 8
    %v548 = vld [vmem:[%s547] sm:$0xf]
    %v549 = vld [vmem:[%s547 + $0x4] sm:$0xf]
    %v552 = vunpack.c.l.b16 %v548
    %v553 = vunpack.c.l.b16 %v549
    %v554 = vpack.c.b16 %v553, %v552
    %v557 = vsel %vm296, %v546, 0
    %559 = vmatprep.subr.bf16.mxu0 0
    %560 = vmatpush1.bf16.msra.mxu0 %v554
    %561 = vmatprep.subr.bf16.mxu0 0
    %562 = vmatpush1.bf16.msra.mxu0 0
    %563 = vmatprep.subr.bf16.mxu0 0
    %564 = vmatpush1.bf16.msra.mxu0 0
    %565 = vmatprep.subr.bf16.mxu0 0
    %566 = vmatpush1.bf16.msra.mxu0 0
    %567 = vmatprep.subr.bf16.mxu0 0
    %568 = vmatpush1.bf16.msra.mxu0 0
    %569 = vmatprep.subr.bf16.mxu0 0
    %570 = vmatpush1.bf16.msra.mxu0 0
    %571 = vmatprep.subr.bf16.mxu0 0
    %572 = vmatpush1.bf16.msra.mxu0 0
    %573 = vmatprep.subr.bf16.mxu0 0
    %574 = vmatpush1.bf16.msra.mxu0 0
    %575 = vmatprep.subr.bf16.mxu0 0
    %576 = vmatpush1.bf16.msra.mxu0 0
    %577 = vmatprep.subr.bf16.mxu0 0
    %578 = vmatpush1.bf16.msra.mxu0 0
    %579 = vmatprep.subr.bf16.mxu0 0
    %580 = vmatpush1.bf16.msra.mxu0 0
    %581 = vmatprep.subr.bf16.mxu0 0
    %582 = vmatpush1.bf16.msra.mxu0 0
    %583 = vmatprep.subr.bf16.mxu0 0
    %584 = vmatpush1.bf16.msra.mxu0 0
    %585 = vmatprep.subr.bf16.mxu0 0
    %586 = vmatpush1.bf16.msra.mxu0 0
    %587 = vmatprep.subr.bf16.mxu0 0
    %588 = vmatpush1.bf16.msra.mxu0 0
    %589 = vmatprep.subr.bf16.mxu0 0
    %590 = vmatpush1.bf16.msra.mxu0 0
    %591 = vmatprep.mubr.bf16.mxu0 0
    %592 = vmatmul.mubr.bf16.gmra.mrb[0].mxu0 %v557
    %v593 = vpop.f32.mrb[0].mxu0
    %v594 = vadd.f32 0.0, %v593
    %v595 = vpop.f32.mrb[0].mxu0
    %v596 = vpop.f32.mrb[0].mxu0
    %v597 = vadd.f32 0.0, %v596
    %v598 = vpop.f32.mrb[0].mxu0
    %599 = vdwg.mxu0
    %v602 = vunpack.c.l.b16 %v419
    %v603 = vunpack.c.l.b16 %v420
    %v604 = vpack.c.b16 %v603, %v602
    %v607 = vsel %vm296, %v418, 0
    %609 = vmatprep.subr.bf16.mxu0 0
    %610 = vmatpush1.bf16.msra.mxu0 %v604
    %611 = vmatprep.subr.bf16.mxu0 0
    %612 = vmatpush1.bf16.msra.mxu0 0
    %613 = vmatprep.subr.bf16.mxu0 0
    %614 = vmatpush1.bf16.msra.mxu0 0
    %615 = vmatprep.subr.bf16.mxu0 0
    %616 = vmatpush1.bf16.msra.mxu0 0
    %617 = vmatprep.subr.bf16.mxu0 0
    %618 = vmatpush1.bf16.msra.mxu0 0
    %619 = vmatprep.subr.bf16.mxu0 0
    %620 = vmatpush1.bf16.msra.mxu0 0
    %621 = vmatprep.subr.bf16.mxu0 0
    %622 = vmatpush1.bf16.msra.mxu0 0
    %623 = vmatprep.subr.bf16.mxu0 0
    %624 = vmatpush1.bf16.msra.mxu0 0
    %625 = vmatprep.subr.bf16.mxu0 0
    %626 = vmatpush1.bf16.msra.mxu0 0
    %627 = vmatprep.subr.bf16.mxu0 0
    %628 = vmatpush1.bf16.msra.mxu0 0
    %629 = vmatprep.subr.bf16.mxu0 0
    %630 = vmatpush1.bf16.msra.mxu0 0
    %631 = vmatprep.subr.bf16.mxu0 0
    %632 = vmatpush1.bf16.msra.mxu0 0
    %633 = vmatprep.subr.bf16.mxu0 0
    %634 = vmatpush1.bf16.msra.mxu0 0
    %635 = vmatprep.subr.bf16.mxu0 0
    %636 = vmatpush1.bf16.msra.mxu0 0
    %637 = vmatprep.subr.bf16.mxu0 0
    %638 = vmatpush1.bf16.msra.mxu0 0
    %639 = vmatprep.subr.bf16.mxu0 0
    %640 = vmatpush1.bf16.msra.mxu0 0
    %641 = vmatprep.mubr.bf16.mxu0 0
    %642 = vmatmul.mubr.bf16.gmra.mrb[0].mxu0 %v607
    %v643 = vpop.f32.mrb[0].mxu0
    %v644 = vadd.f32 %v594, %v643
    %v645 = vpop.f32.mrb[0].mxu0
    %v646 = vpop.f32.mrb[0].mxu0
    %v647 = vadd.f32 %v597, %v646
    %v648 = vpop.f32.mrb[0].mxu0
    %649 = vdwg.mxu0
    %v650 = vlaneseq
    %v651 = vshrl.u32 %v650, 7
    %v652 = vsub.s32 0, %v651
    %v653 = vrot.slane %v223, %v652
    %v654 = vadd.f32 %v644, %v653
    %v655 = vadd.f32 %v647, %v653
    %v656 = vadd.f32 %v219, %v654
    %v657 = vadd.f32 %v220, %v655
    %v658 = vsel %vm181, %v656, 0.0
    %659 = vadd.xlane.f32.xlu0 %v658
    %v660 = vpop.xlane.xlu0 %659
    %v661 = vsel %vm181, %v657, 0.0
    %662 = vadd.xlane.f32.xlu0 %v661
    %v663 = vpop.xlane.xlu0 %662
    %v664 = vmul.f32 %v660, %v188
    %v665 = vmul.f32 %v663, %v188
    %v666 = vsub.f32 %v656, %v664
    %v667 = vsub.f32 %v657, %v665
    %v668 = vmul.f32 %v666, %v666
    %v669 = vmul.f32 %v667, %v667
    %v670 = vsel %vm181, %v668, 0.0
    %671 = vadd.xlane.f32.xlu0 %v670
    %v672 = vpop.xlane.xlu0 %671
    %v673 = vsel %vm181, %v669, 0.0
    %674 = vadd.xlane.f32.xlu0 %v673
    %v675 = vpop.xlane.xlu0 %674
    %v676 = vmul.f32 %v672, %v188
    %v677 = vmul.f32 %v675, %v188
    %v678 = vadd.f32 %v676, 1e-12
    %v679 = vadd.f32 %v677, 1e-12
    %v680 = vrsqrt.pop %v678
    %v681 = vrsqrt.pop %v679
    %v682 = vmul.f32 %v666, %v680
    %v683 = vmul.f32 %v667, %v681
    %v684 = vlaneseq
    %v685 = vshrl.u32 %v684, 7
    %v686 = vsub.s32 1, %v685
    %v687 = vrot.slane %v223, %v686
    %v688 = vmul.f32 %v682, %v687
    %v689 = vmul.f32 %v683, %v687
    %v690 = vlaneseq
    %v691 = vshrl.u32 %v690, 7
    %v692 = vsub.s32 2, %v691
    %v693 = vrot.slane %v223, %v692
    %v694 = vadd.f32 %v688, %v693
    %v695 = vadd.f32 %v689, %v693
    %v696 = vpack.c.bf16 %v695, %v694
    %v697 = vld [vmem:[%s9] sm:$0xf]
    %v698 = vld [vmem:[%s9 + $0x4] sm:$0xf]
    %v699 = vld [vmem:[%s9 + $0x8] sm:$0xf]
    %v700 = vld [vmem:[%s9 + $0xc] sm:$0xf]
    %v701 = vld [vmem:[%s10] sm:$0x1]
    %v703 = vlaneseq
    %v704 = vshrl.u32 %v703, 7
    %v705 = vsub.s32 0, %v704
    %v706 = vrot.slane %v701, %v705
    %v712 = vunpack.c.l.b16 %v697
    %v713 = vunpack.c.l.b16 %v698
    %v714 = vunpack.c.l.b16 %v699
    %v715 = vunpack.c.l.b16 %v700
    %v716 = vpack.c.b16 %v713, %v712
    %v717 = vpack.c.b16 %v715, %v714
    %v721 = vsel %vm181, %v696, 0
    %723 = vmatprep.subr.bf16.mxu0 0
    %724 = vmatpush1.bf16.msra.mxu0 %v716
    %725 = vmatprep.subr.bf16.mxu0 0
    %726 = vmatpush1.bf16.msra.mxu0 %v717
    %727 = vmatprep.subr.bf16.mxu0 0
    %728 = vmatpush1.bf16.msra.mxu0 0
    %729 = vmatprep.subr.bf16.mxu0 0
    %730 = vmatpush1.bf16.msra.mxu0 0
    %731 = vmatprep.subr.bf16.mxu0 0
    %732 = vmatpush1.bf16.msra.mxu0 0
    %733 = vmatprep.subr.bf16.mxu0 0
    %734 = vmatpush1.bf16.msra.mxu0 0
    %735 = vmatprep.subr.bf16.mxu0 0
    %736 = vmatpush1.bf16.msra.mxu0 0
    %737 = vmatprep.subr.bf16.mxu0 0
    %738 = vmatpush1.bf16.msra.mxu0 0
    %739 = vmatprep.subr.bf16.mxu0 0
    %740 = vmatpush1.bf16.msra.mxu0 0
    %741 = vmatprep.subr.bf16.mxu0 0
    %742 = vmatpush1.bf16.msra.mxu0 0
    %743 = vmatprep.subr.bf16.mxu0 0
    %744 = vmatpush1.bf16.msra.mxu0 0
    %745 = vmatprep.subr.bf16.mxu0 0
    %746 = vmatpush1.bf16.msra.mxu0 0
    %747 = vmatprep.subr.bf16.mxu0 0
    %748 = vmatpush1.bf16.msra.mxu0 0
    %749 = vmatprep.subr.bf16.mxu0 0
    %750 = vmatpush1.bf16.msra.mxu0 0
    %751 = vmatprep.subr.bf16.mxu0 0
    %752 = vmatpush1.bf16.msra.mxu0 0
    %753 = vmatprep.subr.bf16.mxu0 0
    %754 = vmatpush1.bf16.msra.mxu0 0
    %755 = vmatprep.mubr.bf16.mxu0 0
    %756 = vmatmul.mubr.bf16.gmra.mrb[0].mxu0 %v721
    %v757 = vpop.f32.mrb[0].mxu0
    %v758 = vadd.f32 %v706, %v757
    %v759 = vpop.f32.mrb[0].mxu0
    %v760 = vpop.f32.mrb[0].mxu0
    %v761 = vadd.f32 %v706, %v760
    %v762 = vpop.f32.mrb[0].mxu0
    %763 = vdwg.mxu0
    %v764 = vmul.f32 %v758, 0.5
    %v765 = vmul.f32 %v761, 0.5
    %v766 = vmul.f32 %v758, 0.044715
    %v767 = vmul.f32 %v761, 0.044715
    %v768 = vmul.f32 %v766, %v758
    %v769 = vmul.f32 %v767, %v761
    %v770 = vmul.f32 %v768, %v758
    %v771 = vmul.f32 %v769, %v761
    %v772 = vadd.f32 %v758, %v770
    %v773 = vadd.f32 %v761, %v771
    %v774 = vmul.f32 %v772, 0.7978846
    %v775 = vmul.f32 %v773, 0.7978846
    %v776 = vtanh.pop %v774
    %v777 = vtanh.pop %v775
    %v778 = vadd.f32 %v776, 1.0
    %v779 = vadd.f32 %v777, 1.0
    %v780 = vmul.f32 %v764, %v778
    %v781 = vmul.f32 %v765, %v779
    %v782 = vpack.c.bf16 %v781, %v780
    %v783 = vld [vmem:[%s11] sm:$0xf]
    %v784 = vld [vmem:[%s11 + $0x4] sm:$0xf]
    %v785 = vld [vmem:[%s11 + $0x8] sm:$0xf]
    %v786 = vld [vmem:[%s11 + $0xc] sm:$0xf]
    %v787 = vld [vmem:[%s11 + $0x10] sm:$0xf]
    %v788 = vld [vmem:[%s11 + $0x14] sm:$0xf]
    %v789 = vld [vmem:[%s11 + $0x18] sm:$0xf]
    %v790 = vld [vmem:[%s11 + $0x1c] sm:$0xf]
    %v791 = vld [vmem:[%s11 + $0x20] sm:$0xf]
    %v792 = vld [vmem:[%s11 + $0x24] sm:$0xf]
    %v793 = vld [vmem:[%s11 + $0x28] sm:$0xf]
    %v794 = vld [vmem:[%s11 + $0x2c] sm:$0xf]
    %v795 = vld [vmem:[%s11 + $0x30] sm:$0xf]
    %v796 = vld [vmem:[%s11 + $0x34] sm:$0xf]
    %v797 = vld [vmem:[%s11 + $0x38] sm:$0xf]
    %v798 = vld [vmem:[%s11 + $0x3c] sm:$0xf]
    %v799 = vlaneseq
    %v800 = vshrl.u32 %v799, 7
    %v801 = vsub.s32 3, %v800
    %v802 = vrot.slane %v223, %v801
    %v819 = vunpack.c.l.b16 %v783
    %v820 = vunpack.c.l.b16 %v784
    %v821 = vunpack.c.l.b16 %v785
    %v822 = vunpack.c.l.b16 %v786
    %v823 = vunpack.c.l.b16 %v787
    %v824 = vunpack.c.l.b16 %v788
    %v825 = vunpack.c.l.b16 %v789
    %v826 = vunpack.c.l.b16 %v790
    %v827 = vunpack.c.l.b16 %v791
    %v828 = vunpack.c.l.b16 %v792
    %v829 = vunpack.c.l.b16 %v793
    %v830 = vunpack.c.l.b16 %v794
    %v831 = vunpack.c.l.b16 %v795
    %v832 = vunpack.c.l.b16 %v796
    %v833 = vunpack.c.l.b16 %v797
    %v834 = vunpack.c.l.b16 %v798
    %v835 = vpack.c.b16 %v820, %v819
    %v836 = vpack.c.b16 %v822, %v821
    %v837 = vpack.c.b16 %v824, %v823
    %v838 = vpack.c.b16 %v826, %v825
    %v839 = vpack.c.b16 %v828, %v827
    %v840 = vpack.c.b16 %v830, %v829
    %v841 = vpack.c.b16 %v832, %v831
    %v842 = vpack.c.b16 %v834, %v833
    %851 = vmatprep.subr.bf16.mxu0 0
    %852 = vmatpush1.bf16.msra.mxu0 %v835
    %853 = vmatprep.subr.bf16.mxu0 0
    %854 = vmatpush1.bf16.msra.mxu0 %v836
    %855 = vmatprep.subr.bf16.mxu0 0
    %856 = vmatpush1.bf16.msra.mxu0 %v837
    %857 = vmatprep.subr.bf16.mxu0 0
    %858 = vmatpush1.bf16.msra.mxu0 %v838
    %859 = vmatprep.subr.bf16.mxu0 0
    %860 = vmatpush1.bf16.msra.mxu0 %v839
    %861 = vmatprep.subr.bf16.mxu0 0
    %862 = vmatpush1.bf16.msra.mxu0 %v840
    %863 = vmatprep.subr.bf16.mxu0 0
    %864 = vmatpush1.bf16.msra.mxu0 %v841
    %865 = vmatprep.subr.bf16.mxu0 0
    %866 = vmatpush1.bf16.msra.mxu0 %v842
    %867 = vmatprep.subr.bf16.mxu0 0
    %868 = vmatpush1.bf16.msra.mxu0 0
    %869 = vmatprep.subr.bf16.mxu0 0
    %870 = vmatpush1.bf16.msra.mxu0 0
    %871 = vmatprep.subr.bf16.mxu0 0
    %872 = vmatpush1.bf16.msra.mxu0 0
    %873 = vmatprep.subr.bf16.mxu0 0
    %874 = vmatpush1.bf16.msra.mxu0 0
    %875 = vmatprep.subr.bf16.mxu0 0
    %876 = vmatpush1.bf16.msra.mxu0 0
    %877 = vmatprep.subr.bf16.mxu0 0
    %878 = vmatpush1.bf16.msra.mxu0 0
    %879 = vmatprep.subr.bf16.mxu0 0
    %880 = vmatpush1.bf16.msra.mxu0 0
    %881 = vmatprep.subr.bf16.mxu0 0
    %882 = vmatpush1.bf16.msra.mxu0 0
    %883 = vmatprep.mubr.bf16.mxu0 0
    %884 = vmatmul.mubr.bf16.gmra.mrb[0].mxu0 %v782
    %v885 = vpop.f32.mrb[0].mxu0
    %v886 = vadd.f32 %v802, %v885
    %v887 = vpop.f32.mrb[0].mxu0
    %v888 = vpop.f32.mrb[0].mxu0
    %v889 = vadd.f32 %v802, %v888
    %v890 = vpop.f32.mrb[0].mxu0
    %891 = vdwg.mxu0
    %v892 = vadd.f32 %v694, %v886
    %v893 = vadd.f32 %v695, %v889
    %v894 = vsel %vm181, %v892, 0.0
    %895 = vadd.xlane.f32.xlu0 %v894
    %v896 = vpop.xlane.xlu0 %895
    %v897 = vsel %vm181, %v893, 0.0
    %898 = vadd.xlane.f32.xlu0 %v897
    %v899 = vpop.xlane.xlu0 %898
    %v900 = vmul.f32 %v896, %v188
    %v901 = vmul.f32 %v899, %v188
    %v902 = vsub.f32 %v892, %v900
    %v903 = vsub.f32 %v893, %v901
    %v904 = vmul.f32 %v902, %v902
    %v905 = vmul.f32 %v903, %v903
    %v906 = vsel %vm181, %v904, 0.0
    %907 = vadd.xlane.f32.xlu0 %v906
    %v908 = vpop.xlane.xlu0 %907
    %v909 = vsel %vm181, %v905, 0.0
    %910 = vadd.xlane.f32.xlu0 %v909
    %v911 = vpop.xlane.xlu0 %910
    %v912 = vmul.f32 %v908, %v188
    %v913 = vmul.f32 %v911, %v188
    %v914 = vadd.f32 %v912, 1e-12
    %v915 = vadd.f32 %v913, 1e-12
    %v916 = vrsqrt.pop %v914
    %v917 = vrsqrt.pop %v915
    %v918 = vmul.f32 %v902, %v916
    %v919 = vmul.f32 %v903, %v917
    %v920 = vlaneseq
    %v921 = vshrl.u32 %v920, 7
    %v922 = vsub.s32 4, %v921
    %v923 = vrot.slane %v223, %v922
    %v924 = vmul.f32 %v918, %v923
    %v925 = vmul.f32 %v919, %v923
    %v926 = vlaneseq
    %v927 = vshrl.u32 %v926, 7
    %v928 = vsub.s32 5, %v927
    %v929 = vrot.slane %v223, %v928
    %v930 = vadd.f32 %v924, %v929
    %v931 = vadd.f32 %v925, %v929
    %s932 = scalar_lea.vmem %s8, 8
    %v933 = vld [vmem:[%s932] sm:$0x3f]
    %v934 = vpack.c.bf16 %v931, %v930
    %s935 = scalar_lea.vmem %s5, 16
    %v936 = vld [vmem:[%s935] sm:$0xf]
    %v937 = vld [vmem:[%s935 + $0x4] sm:$0xf]
    %v938 = vld [vmem:[%s935 + $0x8] sm:$0xf]
    %v939 = vld [vmem:[%s935 + $0xc] sm:$0xf]
    %s940 = scalar_lea.vmem %s6, 1
    %v941 = vld [vmem:[%s940] sm:$0x1]
    %v943 = vlaneseq
    %v944 = vshrl.u32 %v943, 7
    %v945 = vsub.s32 0, %v944
    %v946 = vrot.slane %v941, %v945
    %v952 = vunpack.c.l.b16 %v936
    %v953 = vunpack.c.l.b16 %v937
    %v954 = vunpack.c.l.b16 %v938
    %v955 = vunpack.c.l.b16 %v939
    %v956 = vpack.c.b16 %v953, %v952
    %v957 = vpack.c.b16 %v955, %v954
    %v961 = vsel %vm181, %v934, 0
    %963 = vmatprep.subr.bf16.mxu0 0
    %964 = vmatpush1.bf16.msra.mxu0 %v956
    %965 = vmatprep.subr.bf16.mxu0 0
    %966 = vmatpush1.bf16.msra.mxu0 %v957
    %967 = vmatprep.subr.bf16.mxu0 0
    %968 = vmatpush1.bf16.msra.mxu0 0
    %969 = vmatprep.subr.bf16.mxu0 0
    %970 = vmatpush1.bf16.msra.mxu0 0
    %971 = vmatprep.subr.bf16.mxu0 0
    %972 = vmatpush1.bf16.msra.mxu0 0
    %973 = vmatprep.subr.bf16.mxu0 0
    %974 = vmatpush1.bf16.msra.mxu0 0
    %975 = vmatprep.subr.bf16.mxu0 0
    %976 = vmatpush1.bf16.msra.mxu0 0
    %977 = vmatprep.subr.bf16.mxu0 0
    %978 = vmatpush1.bf16.msra.mxu0 0
    %979 = vmatprep.subr.bf16.mxu0 0
    %980 = vmatpush1.bf16.msra.mxu0 0
    %981 = vmatprep.subr.bf16.mxu0 0
    %982 = vmatpush1.bf16.msra.mxu0 0
    %983 = vmatprep.subr.bf16.mxu0 0
    %984 = vmatpush1.bf16.msra.mxu0 0
    %985 = vmatprep.subr.bf16.mxu0 0
    %986 = vmatpush1.bf16.msra.mxu0 0
    %987 = vmatprep.subr.bf16.mxu0 0
    %988 = vmatpush1.bf16.msra.mxu0 0
    %989 = vmatprep.subr.bf16.mxu0 0
    %990 = vmatpush1.bf16.msra.mxu0 0
    %991 = vmatprep.subr.bf16.mxu0 0
    %992 = vmatpush1.bf16.msra.mxu0 0
    %993 = vmatprep.subr.bf16.mxu0 0
    %994 = vmatpush1.bf16.msra.mxu0 0
    %995 = vmatprep.mubr.bf16.mxu0 0
    %996 = vmatmul.mubr.bf16.gmra.mrb[0].mxu0 %v961
    %v997 = vpop.f32.mrb[0].mxu0
    %v998 = vadd.f32 %v946, %v997
    %v999 = vpop.f32.mrb[0].mxu0
    %v1000 = vpop.f32.mrb[0].mxu0
    %v1001 = vadd.f32 %v946, %v1000
    %v1002 = vpop.f32.mrb[0].mxu0
    %1003 = vdwg.mxu0
    %v1004 = vpack.c.bf16 %v1001, %v998
    %1006 = vrot.lane.b32.xlu0 %v1004, 96
    %v1007 = vpop.permute.xlu0 %1006
    %v1009 = vsel %vm296, %v1004, 0
    %v1012 = vsel %vm296, %v1007, 0
    %1014 = vmatprep.subr.bf16.mxu0 0
    %1015 = vmatpush1.bf16.xpose.msra.mxu0 %v1012
    %1016 = vmatprep.subr.bf16.mxu0 0
    %1017 = vmatpush1.bf16.xpose.msra.mxu0 0
    %1018 = vmatprep.subr.bf16.mxu0 0
    %1019 = vmatpush1.bf16.xpose.msra.mxu0 0
    %1020 = vmatprep.subr.bf16.mxu0 0
    %1021 = vmatpush1.bf16.xpose.msra.mxu0 0
    %1022 = vmatprep.subr.bf16.mxu0 0
    %1023 = vmatpush1.bf16.xpose.msra.mxu0 0
    %1024 = vmatprep.subr.bf16.mxu0 0
    %1025 = vmatpush1.bf16.xpose.msra.mxu0 0
    %1026 = vmatprep.subr.bf16.mxu0 0
    %1027 = vmatpush1.bf16.xpose.msra.mxu0 0
    %1028 = vmatprep.subr.bf16.mxu0 0
    %1029 = vmatpush1.bf16.xpose.msra.mxu0 0
    %1030 = vmatprep.subr.bf16.mxu0 0
    %1031 = vmatpush1.bf16.xpose.msra.mxu0 0
    %1032 = vmatprep.subr.bf16.mxu0 0
    %1033 = vmatpush1.bf16.xpose.msra.mxu0 0
    %1034 = vmatprep.subr.bf16.mxu0 0
    %1035 = vmatpush1.bf16.xpose.msra.mxu0 0
    %1036 = vmatprep.subr.bf16.mxu0 0
    %1037 = vmatpush1.bf16.xpose.msra.mxu0 0
    %1038 = vmatprep.subr.bf16.mxu0 0
    %1039 = vmatpush1.bf16.xpose.msra.mxu0 0
    %1040 = vmatprep.subr.bf16.mxu0 0
    %1041 = vmatpush1.bf16.xpose.msra.mxu0 0
    %1042 = vmatprep.subr.bf16.mxu0 0
    %1043 = vmatpush1.bf16.xpose.msra.mxu0 0
    %1044 = vmatprep.subr.bf16.mxu0 0
    %1045 = vmatpush1.bf16.xpose.msra.mxu0 0
    %1046 = vmatprep.mubr.bf16.mxu0 0
    %1047 = vmatmul.mubr.bf16.gmra.mrb[0].mxu0 %v1009
    %v1048 = vpop.f32.mrb[0].mxu0
    %v1049 = vadd.f32 0.0, %v1048
    %v1050 = vpop.f32.mrb[0].mxu0
    %v1051 = vpop.f32.mrb[0].mxu0
    %v1052 = vadd.f32 0.0, %v1051
    %v1053 = vpop.f32.mrb[0].mxu0
    %1054 = vdwg.mxu0
    %v1055 = vmul.f32 %v1049, 0.25
    %v1056 = vmul.f32 %v1052, 0.25
    %v1057 = vadd.f32 %v1055, %v221
    %v1058 = vadd.f32 %v1056, %v222
    %v1059 = vsel %vm296, %v1057, -inf
    %1060 = vmax.xlane.f32.xlu0 %v1059
    %v1061 = vpop.xlane.xlu0 %1060
    %v1062 = vsel %vm296, %v1058, -inf
    %1063 = vmax.xlane.f32.xlu0 %v1062
    %v1064 = vpop.xlane.xlu0 %1063
    %v1065 = vsub.f32 %v1057, %v1061
    %v1066 = vsub.f32 %v1058, %v1064
    %v1067 = vmul.f32 %v1065, 1.442695
    %v1068 = vpow.pop %v1067
    %v1069 = vmul.f32 %v1066, 1.442695
    %v1070 = vpow.pop %v1069
    %v1071 = vsel %vm296, %v1068, 0.0
    %1072 = vadd.xlane.f32.xlu0 %v1071
    %v1073 = vpop.xlane.xlu0 %1072
    %v1074 = vsel %vm296, %v1070, 0.0
    %1075 = vadd.xlane.f32.xlu0 %v1074
    %v1076 = vpop.xlane.xlu0 %1075
    %v1077 = vrcp.pop %v1073
    %v1078 = vrcp.pop %v1076
    %v1079 = vmul.f32 %v1068, %v1077
    %v1080 = vmul.f32 %v1070, %v1078
    %v1081 = vpack.c.bf16 %v1080, %v1079
    %1082 = vrot.lane.b32.xlu0 %v1004, 64
    %v1083 = vpop.permute.xlu0 %1082
    %v1086 = vsel %vm296, %v1081, 0
    %1088 = vmatprep.subr.bf16.mxu0 0
    %1089 = vmatpush1.bf16.msra.mxu0 %v1083
    %1090 = vmatprep.subr.bf16.mxu0 0
    %1091 = vmatpush1.bf16.msra.mxu0 0
    %1092 = vmatprep.subr.bf16.mxu0 0
    %1093 = vmatpush1.bf16.msra.mxu0 0
    %1094 = vmatprep.subr.bf16.mxu0 0
    %1095 = vmatpush1.bf16.msra.mxu0 0
    %1096 = vmatprep.subr.bf16.mxu0 0
    %1097 = vmatpush1.bf16.msra.mxu0 0
    %1098 = vmatprep.subr.bf16.mxu0 0
    %1099 = vmatpush1.bf16.msra.mxu0 0
    %1100 = vmatprep.subr.bf16.mxu0 0
    %1101 = vmatpush1.bf16.msra.mxu0 0
    %1102 = vmatprep.subr.bf16.mxu0 0
    %1103 = vmatpush1.bf16.msra.mxu0 0
    %1104 = vmatprep.subr.bf16.mxu0 0
    %1105 = vmatpush1.bf16.msra.mxu0 0
    %1106 = vmatprep.subr.bf16.mxu0 0
    %1107 = vmatpush1.bf16.msra.mxu0 0
    %1108 = vmatprep.subr.bf16.mxu0 0
    %1109 = vmatpush1.bf16.msra.mxu0 0
    %1110 = vmatprep.subr.bf16.mxu0 0
    %1111 = vmatpush1.bf16.msra.mxu0 0
    %1112 = vmatprep.subr.bf16.mxu0 0
    %1113 = vmatpush1.bf16.msra.mxu0 0
    %1114 = vmatprep.subr.bf16.mxu0 0
    %1115 = vmatpush1.bf16.msra.mxu0 0
    %1116 = vmatprep.subr.bf16.mxu0 0
    %1117 = vmatpush1.bf16.msra.mxu0 0
    %1118 = vmatprep.subr.bf16.mxu0 0
    %1119 = vmatpush1.bf16.msra.mxu0 0
    %1120 = vmatprep.mubr.bf16.mxu0 0
    %1121 = vmatmul.mubr.bf16.gmra.mrb[0].mxu0 %v1086
    %v1122 = vpop.f32.mrb[0].mxu0
    %v1123 = vadd.f32 0.0, %v1122
    %v1124 = vpop.f32.mrb[0].mxu0
    %v1125 = vpop.f32.mrb[0].mxu0
    %v1126 = vadd.f32 0.0, %v1125
    %v1127 = vpop.f32.mrb[0].mxu0
    %1128 = vdwg.mxu0
    %v1129 = vpack.c.bf16 %v1126, %v1123
    %s1130 = scalar_lea.vmem %s7, 16
    %v1131 = vld [vmem:[%s1130] sm:$0xf]
    %v1132 = vld [vmem:[%s1130 + $0x4] sm:$0xf]
    %1133 = vrot.lane.b32.xlu0 %v1004, 112
    %v1134 = vpop.permute.xlu0 %1133
    %1135 = vrot.lane.b32.xlu0 %v1004, 80
    %v1136 = vpop.permute.xlu0 %1135
    %v1138 = vsel %vm296, %v1134, 0
    %v1141 = vsel %vm296, %v1136, 0
    %1143 = vmatprep.subr.bf16.mxu0 0
    %1144 = vmatpush1.bf16.xpose.msra.mxu0 %v1141
    %1145 = vmatprep.subr.bf16.mxu0 0
    %1146 = vmatpush1.bf16.xpose.msra.mxu0 0
    %1147 = vmatprep.subr.bf16.mxu0 0
    %1148 = vmatpush1.bf16.xpose.msra.mxu0 0
    %1149 = vmatprep.subr.bf16.mxu0 0
    %1150 = vmatpush1.bf16.xpose.msra.mxu0 0
    %1151 = vmatprep.subr.bf16.mxu0 0
    %1152 = vmatpush1.bf16.xpose.msra.mxu0 0
    %1153 = vmatprep.subr.bf16.mxu0 0
    %1154 = vmatpush1.bf16.xpose.msra.mxu0 0
    %1155 = vmatprep.subr.bf16.mxu0 0
    %1156 = vmatpush1.bf16.xpose.msra.mxu0 0
    %1157 = vmatprep.subr.bf16.mxu0 0
    %1158 = vmatpush1.bf16.xpose.msra.mxu0 0
    %1159 = vmatprep.subr.bf16.mxu0 0
    %1160 = vmatpush1.bf16.xpose.msra.mxu0 0
    %1161 = vmatprep.subr.bf16.mxu0 0
    %1162 = vmatpush1.bf16.xpose.msra.mxu0 0
    %1163 = vmatprep.subr.bf16.mxu0 0
    %1164 = vmatpush1.bf16.xpose.msra.mxu0 0
    %1165 = vmatprep.subr.bf16.mxu0 0
    %1166 = vmatpush1.bf16.xpose.msra.mxu0 0
    %1167 = vmatprep.subr.bf16.mxu0 0
    %1168 = vmatpush1.bf16.xpose.msra.mxu0 0
    %1169 = vmatprep.subr.bf16.mxu0 0
    %1170 = vmatpush1.bf16.xpose.msra.mxu0 0
    %1171 = vmatprep.subr.bf16.mxu0 0
    %1172 = vmatpush1.bf16.xpose.msra.mxu0 0
    %1173 = vmatprep.subr.bf16.mxu0 0
    %1174 = vmatpush1.bf16.xpose.msra.mxu0 0
    %1175 = vmatprep.mubr.bf16.mxu0 0
    %1176 = vmatmul.mubr.bf16.gmra.mrb[0].mxu0 %v1138
    %v1177 = vpop.f32.mrb[0].mxu0
    %v1178 = vadd.f32 0.0, %v1177
    %v1179 = vpop.f32.mrb[0].mxu0
    %v1180 = vpop.f32.mrb[0].mxu0
    %v1181 = vadd.f32 0.0, %v1180
    %v1182 = vpop.f32.mrb[0].mxu0
    %1183 = vdwg.mxu0
    %v1184 = vmul.f32 %v1178, 0.25
    %v1185 = vmul.f32 %v1181, 0.25
    %v1186 = vadd.f32 %v1184, %v221
    %v1187 = vadd.f32 %v1185, %v222
    %v1188 = vsel %vm296, %v1186, -inf
    %1189 = vmax.xlane.f32.xlu0 %v1188
    %v1190 = vpop.xlane.xlu0 %1189
    %v1191 = vsel %vm296, %v1187, -inf
    %1192 = vmax.xlane.f32.xlu0 %v1191
    %v1193 = vpop.xlane.xlu0 %1192
    %v1194 = vsub.f32 %v1186, %v1190
    %v1195 = vsub.f32 %v1187, %v1193
    %v1196 = vmul.f32 %v1194, 1.442695
    %v1197 = vpow.pop %v1196
    %v1198 = vmul.f32 %v1195, 1.442695
    %v1199 = vpow.pop %v1198
    %v1200 = vsel %vm296, %v1197, 0.0
    %1201 = vadd.xlane.f32.xlu0 %v1200
    %v1202 = vpop.xlane.xlu0 %1201
    %v1203 = vsel %vm296, %v1199, 0.0
    %1204 = vadd.xlane.f32.xlu0 %v1203
    %v1205 = vpop.xlane.xlu0 %1204
    %v1206 = vrcp.pop %v1202
    %v1207 = vrcp.pop %v1205
    %v1208 = vmul.f32 %v1197, %v1206
    %v1209 = vmul.f32 %v1199, %v1207
    %v1210 = vpack.c.bf16 %v1209, %v1208
    %1211 = vrot.lane.b32.xlu0 %v1004, 48
    %v1212 = vpop.permute.xlu0 %1211
    %v1215 = vsel %vm296, %v1210, 0
    %1217 = vmatprep.subr.bf16.mxu0 0
    %1218 = vmatpush1.bf16.msra.mxu0 %v1212
    %1219 = vmatprep.subr.bf16.mxu0 0
    %1220 = vmatpush1.bf16.msra.mxu0 0
    %1221 = vmatprep.subr.bf16.mxu0 0
    %1222 = vmatpush1.bf16.msra.mxu0 0
    %1223 = vmatprep.subr.bf16.mxu0 0
    %1224 = vmatpush1.bf16.msra.mxu0 0
    %1225 = vmatprep.subr.bf16.mxu0 0
    %1226 = vmatpush1.bf16.msra.mxu0 0
    %1227 = vmatprep.subr.bf16.mxu0 0
    %1228 = vmatpush1.bf16.msra.mxu0 0
    %1229 = vmatprep.subr.bf16.mxu0 0
    %1230 = vmatpush1.bf16.msra.mxu0 0
    %1231 = vmatprep.subr.bf16.mxu0 0
    %1232 = vmatpush1.bf16.msra.mxu0 0
    %1233 = vmatprep.subr.bf16.mxu0 0
    %1234 = vmatpush1.bf16.msra.mxu0 0
    %1235 = vmatprep.subr.bf16.mxu0 0
    %1236 = vmatpush1.bf16.msra.mxu0 0
    %1237 = vmatprep.subr.bf16.mxu0 0
    %1238 = vmatpush1.bf16.msra.mxu0 0
    %1239 = vmatprep.subr.bf16.mxu0 0
    %1240 = vmatpush1.bf16.msra.mxu0 0
    %1241 = vmatprep.subr.bf16.mxu0 0
    %1242 = vmatpush1.bf16.msra.mxu0 0
    %1243 = vmatprep.subr.bf16.mxu0 0
    %1244 = vmatpush1.bf16.msra.mxu0 0
    %1245 = vmatprep.subr.bf16.mxu0 0
    %1246 = vmatpush1.bf16.msra.mxu0 0
    %1247 = vmatprep.subr.bf16.mxu0 0
    %1248 = vmatpush1.bf16.msra.mxu0 0
    %1249 = vmatprep.mubr.bf16.mxu0 0
    %1250 = vmatmul.mubr.bf16.gmra.mrb[0].mxu0 %v1215
    %v1251 = vpop.f32.mrb[0].mxu0
    %v1252 = vadd.f32 0.0, %v1251
    %v1253 = vpop.f32.mrb[0].mxu0
    %v1254 = vpop.f32.mrb[0].mxu0
    %v1255 = vadd.f32 0.0, %v1254
    %v1256 = vpop.f32.mrb[0].mxu0
    %1257 = vdwg.mxu0
    %v1258 = vpack.c.bf16 %v1255, %v1252
    %s1259 = scalar_lea.vmem %s7, 24
    %v1260 = vld [vmem:[%s1259] sm:$0xf]
    %v1261 = vld [vmem:[%s1259 + $0x4] sm:$0xf]
    %v1264 = vunpack.c.l.b16 %v1260
    %v1265 = vunpack.c.l.b16 %v1261
    %v1266 = vpack.c.b16 %v1265, %v1264
    %v1269 = vsel %vm296, %v1258, 0
    %1271 = vmatprep.subr.bf16.mxu0 0
    %1272 = vmatpush1.bf16.msra.mxu0 %v1266
    %1273 = vmatprep.subr.bf16.mxu0 0
    %1274 = vmatpush1.bf16.msra.mxu0 0
    %1275 = vmatprep.subr.bf16.mxu0 0
    %1276 = vmatpush1.bf16.msra.mxu0 0
    %1277 = vmatprep.subr.bf16.mxu0 0
    %1278 = vmatpush1.bf16.msra.mxu0 0
    %1279 = vmatprep.subr.bf16.mxu0 0
    %1280 = vmatpush1.bf16.msra.mxu0 0
    %1281 = vmatprep.subr.bf16.mxu0 0
    %1282 = vmatpush1.bf16.msra.mxu0 0
    %1283 = vmatprep.subr.bf16.mxu0 0
    %1284 = vmatpush1.bf16.msra.mxu0 0
    %1285 = vmatprep.subr.bf16.mxu0 0
    %1286 = vmatpush1.bf16.msra.mxu0 0
    %1287 = vmatprep.subr.bf16.mxu0 0
    %1288 = vmatpush1.bf16.msra.mxu0 0
    %1289 = vmatprep.subr.bf16.mxu0 0
    %1290 = vmatpush1.bf16.msra.mxu0 0
    %1291 = vmatprep.subr.bf16.mxu0 0
    %1292 = vmatpush1.bf16.msra.mxu0 0
    %1293 = vmatprep.subr.bf16.mxu0 0
    %1294 = vmatpush1.bf16.msra.mxu0 0
    %1295 = vmatprep.subr.bf16.mxu0 0
    %1296 = vmatpush1.bf16.msra.mxu0 0
    %1297 = vmatprep.subr.bf16.mxu0 0
    %1298 = vmatpush1.bf16.msra.mxu0 0
    %1299 = vmatprep.subr.bf16.mxu0 0
    %1300 = vmatpush1.bf16.msra.mxu0 0
    %1301 = vmatprep.subr.bf16.mxu0 0
    %1302 = vmatpush1.bf16.msra.mxu0 0
    %1303 = vmatprep.mubr.bf16.mxu0 0
    %1304 = vmatmul.mubr.bf16.gmra.mrb[0].mxu0 %v1269
    %v1305 = vpop.f32.mrb[0].mxu0
    %v1306 = vadd.f32 0.0, %v1305
    %v1307 = vpop.f32.mrb[0].mxu0
    %v1308 = vpop.f32.mrb[0].mxu0
    %v1309 = vadd.f32 0.0, %v1308
    %v1310 = vpop.f32.mrb[0].mxu0
    %1311 = vdwg.mxu0
    %v1314 = vunpack.c.l.b16 %v1131
    %v1315 = vunpack.c.l.b16 %v1132
    %v1316 = vpack.c.b16 %v1315, %v1314
    %v1319 = vsel %vm296, %v1129, 0
    %1321 = vmatprep.subr.bf16.mxu0 0
    %1322 = vmatpush1.bf16.msra.mxu0 %v1316
    %1323 = vmatprep.subr.bf16.mxu0 0
    %1324 = vmatpush1.bf16.msra.mxu0 0
    %1325 = vmatprep.subr.bf16.mxu0 0
    %1326 = vmatpush1.bf16.msra.mxu0 0
    %1327 = vmatprep.subr.bf16.mxu0 0
    %1328 = vmatpush1.bf16.msra.mxu0 0
    %1329 = vmatprep.subr.bf16.mxu0 0
    %1330 = vmatpush1.bf16.msra.mxu0 0
    %1331 = vmatprep.subr.bf16.mxu0 0
    %1332 = vmatpush1.bf16.msra.mxu0 0
    %1333 = vmatprep.subr.bf16.mxu0 0
    %1334 = vmatpush1.bf16.msra.mxu0 0
    %1335 = vmatprep.subr.bf16.mxu0 0
    %1336 = vmatpush1.bf16.msra.mxu0 0
    %1337 = vmatprep.subr.bf16.mxu0 0
    %1338 = vmatpush1.bf16.msra.mxu0 0
    %1339 = vmatprep.subr.bf16.mxu0 0
    %1340 = vmatpush1.bf16.msra.mxu0 0
    %1341 = vmatprep.subr.bf16.mxu0 0
    %1342 = vmatpush1.bf16.msra.mxu0 0
    %1343 = vmatprep.subr.bf16.mxu0 0
    %1344 = vmatpush1.bf16.msra.mxu0 0
    %1345 = vmatprep.subr.bf16.mxu0 0
    %1346 = vmatpush1.bf16.msra.mxu0 0
    %1347 = vmatprep.subr.bf16.mxu0 0
    %1348 = vmatpush1.bf16.msra.mxu0 0
    %1349 = vmatprep.subr.bf16.mxu0 0
    %1350 = vmatpush1.bf16.msra.mxu0 0
    %1351 = vmatprep.subr.bf16.mxu0 0
    %1352 = vmatpush1.bf16.msra.mxu0 0
    %1353 = vmatprep.mubr.bf16.mxu0 0
    %1354 = vmatmul.mubr.bf16.gmra.mrb[0].mxu0 %v1319
    %v1355 = vpop.f32.mrb[0].mxu0
    %v1356 = vadd.f32 %v1306, %v1355
    %v1357 = vpop.f32.mrb[0].mxu0
    %v1358 = vpop.f32.mrb[0].mxu0
    %v1359 = vadd.f32 %v1309, %v1358
    %v1360 = vpop.f32.mrb[0].mxu0
    %1361 = vdwg.mxu0
    %v1362 = vlaneseq
    %v1363 = vshrl.u32 %v1362, 7
    %v1364 = vsub.s32 0, %v1363
    %v1365 = vrot.slane %v933, %v1364
    %v1366 = vadd.f32 %v1356, %v1365
    %v1367 = vadd.f32 %v1359, %v1365
    %v1368 = vadd.f32 %v930, %v1366
    %v1369 = vadd.f32 %v931, %v1367
    %v1370 = vsel %vm181, %v1368, 0.0
    %1371 = vadd.xlane.f32.xlu0 %v1370
    %v1372 = vpop.xlane.xlu0 %1371
    %v1373 = vsel %vm181, %v1369, 0.0
    %1374 = vadd.xlane.f32.xlu0 %v1373
    %v1375 = vpop.xlane.xlu0 %1374
    %v1376 = vmul.f32 %v1372, %v188
    %v1377 = vmul.f32 %v1375, %v188
    %v1378 = vsub.f32 %v1368, %v1376
    %v1379 = vsub.f32 %v1369, %v1377
    %v1380 = vmul.f32 %v1378, %v1378
    %v1381 = vmul.f32 %v1379, %v1379
    %v1382 = vsel %vm181, %v1380, 0.0
    %1383 = vadd.xlane.f32.xlu0 %v1382
    %v1384 = vpop.xlane.xlu0 %1383
    %v1385 = vsel %vm181, %v1381, 0.0
    %1386 = vadd.xlane.f32.xlu0 %v1385
    %v1387 = vpop.xlane.xlu0 %1386
    %v1388 = vmul.f32 %v1384, %v188
    %v1389 = vmul.f32 %v1387, %v188
    %v1390 = vadd.f32 %v1388, 1e-12
    %v1391 = vadd.f32 %v1389, 1e-12
    %v1392 = vrsqrt.pop %v1390
    %v1393 = vrsqrt.pop %v1391
    %v1394 = vmul.f32 %v1378, %v1392
    %v1395 = vmul.f32 %v1379, %v1393
    %v1396 = vlaneseq
    %v1397 = vshrl.u32 %v1396, 7
    %v1398 = vsub.s32 1, %v1397
    %v1399 = vrot.slane %v933, %v1398
    %v1400 = vmul.f32 %v1394, %v1399
    %v1401 = vmul.f32 %v1395, %v1399
    %v1402 = vlaneseq
    %v1403 = vshrl.u32 %v1402, 7
    %v1404 = vsub.s32 2, %v1403
    %v1405 = vrot.slane %v933, %v1404
    %v1406 = vadd.f32 %v1400, %v1405
    %v1407 = vadd.f32 %v1401, %v1405
    %v1408 = vpack.c.bf16 %v1407, %v1406
    %s1409 = scalar_lea.vmem %s9, 16
    %v1410 = vld [vmem:[%s1409] sm:$0xf]
    %v1411 = vld [vmem:[%s1409 + $0x4] sm:$0xf]
    %v1412 = vld [vmem:[%s1409 + $0x8] sm:$0xf]
    %v1413 = vld [vmem:[%s1409 + $0xc] sm:$0xf]
    %s1414 = scalar_lea.vmem %s10, 1
    %v1415 = vld [vmem:[%s1414] sm:$0x1]
    %v1417 = vlaneseq
    %v1418 = vshrl.u32 %v1417, 7
    %v1419 = vsub.s32 0, %v1418
    %v1420 = vrot.slane %v1415, %v1419
    %v1426 = vunpack.c.l.b16 %v1410
    %v1427 = vunpack.c.l.b16 %v1411
    %v1428 = vunpack.c.l.b16 %v1412
    %v1429 = vunpack.c.l.b16 %v1413
    %v1430 = vpack.c.b16 %v1427, %v1426
    %v1431 = vpack.c.b16 %v1429, %v1428
    %v1435 = vsel %vm181, %v1408, 0
    %1437 = vmatprep.subr.bf16.mxu0 0
    %1438 = vmatpush1.bf16.msra.mxu0 %v1430
    %1439 = vmatprep.subr.bf16.mxu0 0
    %1440 = vmatpush1.bf16.msra.mxu0 %v1431
    %1441 = vmatprep.subr.bf16.mxu0 0
    %1442 = vmatpush1.bf16.msra.mxu0 0
    %1443 = vmatprep.subr.bf16.mxu0 0
    %1444 = vmatpush1.bf16.msra.mxu0 0
    %1445 = vmatprep.subr.bf16.mxu0 0
    %1446 = vmatpush1.bf16.msra.mxu0 0
    %1447 = vmatprep.subr.bf16.mxu0 0
    %1448 = vmatpush1.bf16.msra.mxu0 0
    %1449 = vmatprep.subr.bf16.mxu0 0
    %1450 = vmatpush1.bf16.msra.mxu0 0
    %1451 = vmatprep.subr.bf16.mxu0 0
    %1452 = vmatpush1.bf16.msra.mxu0 0
    %1453 = vmatprep.subr.bf16.mxu0 0
    %1454 = vmatpush1.bf16.msra.mxu0 0
    %1455 = vmatprep.subr.bf16.mxu0 0
    %1456 = vmatpush1.bf16.msra.mxu0 0
    %1457 = vmatprep.subr.bf16.mxu0 0
    %1458 = vmatpush1.bf16.msra.mxu0 0
    %1459 = vmatprep.subr.bf16.mxu0 0
    %1460 = vmatpush1.bf16.msra.mxu0 0
    %1461 = vmatprep.subr.bf16.mxu0 0
    %1462 = vmatpush1.bf16.msra.mxu0 0
    %1463 = vmatprep.subr.bf16.mxu0 0
    %1464 = vmatpush1.bf16.msra.mxu0 0
    %1465 = vmatprep.subr.bf16.mxu0 0
    %1466 = vmatpush1.bf16.msra.mxu0 0
    %1467 = vmatprep.subr.bf16.mxu0 0
    %1468 = vmatpush1.bf16.msra.mxu0 0
    %1469 = vmatprep.mubr.bf16.mxu0 0
    %1470 = vmatmul.mubr.bf16.gmra.mrb[0].mxu0 %v1435
    %v1471 = vpop.f32.mrb[0].mxu0
    %v1472 = vadd.f32 %v1420, %v1471
    %v1473 = vpop.f32.mrb[0].mxu0
    %v1474 = vpop.f32.mrb[0].mxu0
    %v1475 = vadd.f32 %v1420, %v1474
    %v1476 = vpop.f32.mrb[0].mxu0
    %1477 = vdwg.mxu0
    %v1478 = vmul.f32 %v1472, 0.5
    %v1479 = vmul.f32 %v1475, 0.5
    %v1480 = vmul.f32 %v1472, 0.044715
    %v1481 = vmul.f32 %v1475, 0.044715
    %v1482 = vmul.f32 %v1480, %v1472
    %v1483 = vmul.f32 %v1481, %v1475
    %v1484 = vmul.f32 %v1482, %v1472
    %v1485 = vmul.f32 %v1483, %v1475
    %v1486 = vadd.f32 %v1472, %v1484
    %v1487 = vadd.f32 %v1475, %v1485
    %v1488 = vmul.f32 %v1486, 0.7978846
    %v1489 = vmul.f32 %v1487, 0.7978846
    %v1490 = vtanh.pop %v1488
    %v1491 = vtanh.pop %v1489
    %v1492 = vadd.f32 %v1490, 1.0
    %v1493 = vadd.f32 %v1491, 1.0
    %v1494 = vmul.f32 %v1478, %v1492
    %v1495 = vmul.f32 %v1479, %v1493
    %v1496 = vpack.c.bf16 %v1495, %v1494
    %s1497 = scalar_lea.vmem %s11, 64
    %v1498 = vld [vmem:[%s1497] sm:$0xf]
    %v1499 = vld [vmem:[%s1497 + $0x4] sm:$0xf]
    %v1500 = vld [vmem:[%s1497 + $0x8] sm:$0xf]
    %v1501 = vld [vmem:[%s1497 + $0xc] sm:$0xf]
    %v1502 = vld [vmem:[%s1497 + $0x10] sm:$0xf]
    %v1503 = vld [vmem:[%s1497 + $0x14] sm:$0xf]
    %v1504 = vld [vmem:[%s1497 + $0x18] sm:$0xf]
    %v1505 = vld [vmem:[%s1497 + $0x1c] sm:$0xf]
    %v1506 = vld [vmem:[%s1497 + $0x20] sm:$0xf]
    %v1507 = vld [vmem:[%s1497 + $0x24] sm:$0xf]
    %v1508 = vld [vmem:[%s1497 + $0x28] sm:$0xf]
    %v1509 = vld [vmem:[%s1497 + $0x2c] sm:$0xf]
    %v1510 = vld [vmem:[%s1497 + $0x30] sm:$0xf]
    %v1511 = vld [vmem:[%s1497 + $0x34] sm:$0xf]
    %v1512 = vld [vmem:[%s1497 + $0x38] sm:$0xf]
    %v1513 = vld [vmem:[%s1497 + $0x3c] sm:$0xf]
    %v1514 = vlaneseq
    %v1515 = vshrl.u32 %v1514, 7
    %v1516 = vsub.s32 3, %v1515
    %v1517 = vrot.slane %v933, %v1516
    %v1534 = vunpack.c.l.b16 %v1498
    %v1535 = vunpack.c.l.b16 %v1499
    %v1536 = vunpack.c.l.b16 %v1500
    %v1537 = vunpack.c.l.b16 %v1501
    %v1538 = vunpack.c.l.b16 %v1502
    %v1539 = vunpack.c.l.b16 %v1503
    %v1540 = vunpack.c.l.b16 %v1504
    %v1541 = vunpack.c.l.b16 %v1505
    %v1542 = vunpack.c.l.b16 %v1506
    %v1543 = vunpack.c.l.b16 %v1507
    %v1544 = vunpack.c.l.b16 %v1508
    %v1545 = vunpack.c.l.b16 %v1509
    %v1546 = vunpack.c.l.b16 %v1510
    %v1547 = vunpack.c.l.b16 %v1511
    %v1548 = vunpack.c.l.b16 %v1512
    %v1549 = vunpack.c.l.b16 %v1513
    %v1550 = vpack.c.b16 %v1535, %v1534
    %v1551 = vpack.c.b16 %v1537, %v1536
    %v1552 = vpack.c.b16 %v1539, %v1538
    %v1553 = vpack.c.b16 %v1541, %v1540
    %v1554 = vpack.c.b16 %v1543, %v1542
    %v1555 = vpack.c.b16 %v1545, %v1544
    %v1556 = vpack.c.b16 %v1547, %v1546
    %v1557 = vpack.c.b16 %v1549, %v1548
    %1566 = vmatprep.subr.bf16.mxu0 0
    %1567 = vmatpush1.bf16.msra.mxu0 %v1550
    %1568 = vmatprep.subr.bf16.mxu0 0
    %1569 = vmatpush1.bf16.msra.mxu0 %v1551
    %1570 = vmatprep.subr.bf16.mxu0 0
    %1571 = vmatpush1.bf16.msra.mxu0 %v1552
    %1572 = vmatprep.subr.bf16.mxu0 0
    %1573 = vmatpush1.bf16.msra.mxu0 %v1553
    %1574 = vmatprep.subr.bf16.mxu0 0
    %1575 = vmatpush1.bf16.msra.mxu0 %v1554
    %1576 = vmatprep.subr.bf16.mxu0 0
    %1577 = vmatpush1.bf16.msra.mxu0 %v1555
    %1578 = vmatprep.subr.bf16.mxu0 0
    %1579 = vmatpush1.bf16.msra.mxu0 %v1556
    %1580 = vmatprep.subr.bf16.mxu0 0
    %1581 = vmatpush1.bf16.msra.mxu0 %v1557
    %1582 = vmatprep.subr.bf16.mxu0 0
    %1583 = vmatpush1.bf16.msra.mxu0 0
    %1584 = vmatprep.subr.bf16.mxu0 0
    %1585 = vmatpush1.bf16.msra.mxu0 0
    %1586 = vmatprep.subr.bf16.mxu0 0
    %1587 = vmatpush1.bf16.msra.mxu0 0
    %1588 = vmatprep.subr.bf16.mxu0 0
    %1589 = vmatpush1.bf16.msra.mxu0 0
    %1590 = vmatprep.subr.bf16.mxu0 0
    %1591 = vmatpush1.bf16.msra.mxu0 0
    %1592 = vmatprep.subr.bf16.mxu0 0
    %1593 = vmatpush1.bf16.msra.mxu0 0
    %1594 = vmatprep.subr.bf16.mxu0 0
    %1595 = vmatpush1.bf16.msra.mxu0 0
    %1596 = vmatprep.subr.bf16.mxu0 0
    %1597 = vmatpush1.bf16.msra.mxu0 0
    %1598 = vmatprep.mubr.bf16.mxu0 0
    %1599 = vmatmul.mubr.bf16.gmra.mrb[0].mxu0 %v1496
    %v1600 = vpop.f32.mrb[0].mxu0
    %v1601 = vadd.f32 %v1517, %v1600
    %v1602 = vpop.f32.mrb[0].mxu0
    %v1603 = vpop.f32.mrb[0].mxu0
    %v1604 = vadd.f32 %v1517, %v1603
    %v1605 = vpop.f32.mrb[0].mxu0
    %1606 = vdwg.mxu0
    %v1607 = vadd.f32 %v1406, %v1601
    %v1608 = vadd.f32 %v1407, %v1604
    %v1609 = vsel %vm181, %v1607, 0.0
    %1610 = vadd.xlane.f32.xlu0 %v1609
    %v1611 = vpop.xlane.xlu0 %1610
    %v1612 = vsel %vm181, %v1608, 0.0
    %1613 = vadd.xlane.f32.xlu0 %v1612
    %v1614 = vpop.xlane.xlu0 %1613
    %v1615 = vmul.f32 %v1611, %v188
    %v1616 = vmul.f32 %v1614, %v188
    %v1617 = vsub.f32 %v1607, %v1615
    %v1618 = vsub.f32 %v1608, %v1616
    %v1619 = vmul.f32 %v1617, %v1617
    %v1620 = vmul.f32 %v1618, %v1618
    %v1621 = vsel %vm181, %v1619, 0.0
    %1622 = vadd.xlane.f32.xlu0 %v1621
    %v1623 = vpop.xlane.xlu0 %1622
    %v1624 = vsel %vm181, %v1620, 0.0
    %1625 = vadd.xlane.f32.xlu0 %v1624
    %v1626 = vpop.xlane.xlu0 %1625
    %v1627 = vmul.f32 %v1623, %v188
    %v1628 = vmul.f32 %v1626, %v188
    %v1629 = vadd.f32 %v1627, 1e-12
    %v1630 = vadd.f32 %v1628, 1e-12
    %v1631 = vrsqrt.pop %v1629
    %v1632 = vrsqrt.pop %v1630
    %v1633 = vmul.f32 %v1617, %v1631
    %v1634 = vmul.f32 %v1618, %v1632
    %v1635 = vlaneseq
    %v1636 = vshrl.u32 %v1635, 7
    %v1637 = vsub.s32 4, %v1636
    %v1638 = vrot.slane %v933, %v1637
    %v1639 = vmul.f32 %v1633, %v1638
    %v1640 = vmul.f32 %v1634, %v1638
    %v1641 = vlaneseq
    %v1642 = vshrl.u32 %v1641, 7
    %v1643 = vsub.s32 5, %v1642
    %v1644 = vrot.slane %v933, %v1643
    %v1645 = vadd.f32 %v1639, %v1644
    %v1646 = vadd.f32 %v1640, %v1644
    %v1647 = vpack.c.bf16 %v1646, %v1645
    %v1648 = vld [vmem:[%s12] sm:$0xf]
    %v1649 = vld [vmem:[%s12 + $0x4] sm:$0xf]
    %v1650 = vld [vmem:[%s12 + $0x8] sm:$0xf]
    %v1651 = vld [vmem:[%s12 + $0xc] sm:$0xf]
    %v1652 = vld [vmem:[%s13] sm:$0x1]
    %v1653 = vlaneseq
    %v1654 = vshrl.u32 %v1653, 7
    %v1655 = vsub.s32 0, %v1654
    %v1656 = vrot.slane %v1652, %v1655
    %v1661 = vunpack.c.l.b16 %v1648
    %v1662 = vunpack.c.l.b16 %v1649
    %v1663 = vunpack.c.l.b16 %v1650
    %v1664 = vunpack.c.l.b16 %v1651
    %v1665 = vpack.c.b16 %v1662, %v1661
    %v1666 = vpack.c.b16 %v1664, %v1663
    %v1670 = vsel %vm181, %v1647, 0
    %1672 = vmatprep.subr.bf16.mxu0 0
    %1673 = vmatpush1.bf16.msra.mxu0 %v1665
    %1674 = vmatprep.subr.bf16.mxu0 0
    %1675 = vmatpush1.bf16.msra.mxu0 %v1666
    %1676 = vmatprep.subr.bf16.mxu0 0
    %1677 = vmatpush1.bf16.msra.mxu0 0
    %1678 = vmatprep.subr.bf16.mxu0 0
    %1679 = vmatpush1.bf16.msra.mxu0 0
    %1680 = vmatprep.subr.bf16.mxu0 0
    %1681 = vmatpush1.bf16.msra.mxu0 0
    %1682 = vmatprep.subr.bf16.mxu0 0
    %1683 = vmatpush1.bf16.msra.mxu0 0
    %1684 = vmatprep.subr.bf16.mxu0 0
    %1685 = vmatpush1.bf16.msra.mxu0 0
    %1686 = vmatprep.subr.bf16.mxu0 0
    %1687 = vmatpush1.bf16.msra.mxu0 0
    %1688 = vmatprep.subr.bf16.mxu0 0
    %1689 = vmatpush1.bf16.msra.mxu0 0
    %1690 = vmatprep.subr.bf16.mxu0 0
    %1691 = vmatpush1.bf16.msra.mxu0 0
    %1692 = vmatprep.subr.bf16.mxu0 0
    %1693 = vmatpush1.bf16.msra.mxu0 0
    %1694 = vmatprep.subr.bf16.mxu0 0
    %1695 = vmatpush1.bf16.msra.mxu0 0
    %1696 = vmatprep.subr.bf16.mxu0 0
    %1697 = vmatpush1.bf16.msra.mxu0 0
    %1698 = vmatprep.subr.bf16.mxu0 0
    %1699 = vmatpush1.bf16.msra.mxu0 0
    %1700 = vmatprep.subr.bf16.mxu0 0
    %1701 = vmatpush1.bf16.msra.mxu0 0
    %1702 = vmatprep.subr.bf16.mxu0 0
    %1703 = vmatpush1.bf16.msra.mxu0 0
    %1704 = vmatprep.mubr.bf16.mxu0 0
    %1705 = vmatmul.mubr.bf16.gmra.mrb[0].mxu0 %v1670
    %v1706 = vpop.f32.mrb[0].mxu0
    %v1707 = vadd.f32 %v1656, %v1706
    %v1708 = vpop.f32.mrb[0].mxu0
    %v1709 = vpop.f32.mrb[0].mxu0
    %v1710 = vadd.f32 %v1656, %v1709
    %v1711 = vpop.f32.mrb[0].mxu0
    %1712 = vdwg.mxu0
    %v1713 = vmax.f32 %v1707, 0.0
    %v1714 = vmax.f32 %v1710, 0.0
    %v1715 = vpack.c.bf16 %v1714, %v1713
    %s1716 = scalar_lea.vmem %s12, 16
    %v1717 = vld [vmem:[%s1716] sm:$0xf]
    %v1718 = vld [vmem:[%s1716 + $0x4] sm:$0xf]
    %v1719 = vld [vmem:[%s1716 + $0x8] sm:$0xf]
    %v1720 = vld [vmem:[%s1716 + $0xc] sm:$0xf]
    %v1721 = vld [vmem:[%s13 + $0x1] sm:$0x1]
    %v1722 = vlaneseq
    %v1723 = vshrl.u32 %v1722, 7
    %v1724 = vsub.s32 0, %v1723
    %v1725 = vrot.slane %v1721, %v1724
    %v1730 = vunpack.c.l.b16 %v1717
    %v1731 = vunpack.c.l.b16 %v1718
    %v1732 = vunpack.c.l.b16 %v1719
    %v1733 = vunpack.c.l.b16 %v1720
    %v1734 = vpack.c.b16 %v1731, %v1730
    %v1735 = vpack.c.b16 %v1733, %v1732
    %v1739 = vsel %vm181, %v1715, 0
    %1741 = vmatprep.subr.bf16.mxu0 0
    %1742 = vmatpush1.bf16.msra.mxu0 %v1734
    %1743 = vmatprep.subr.bf16.mxu0 0
    %1744 = vmatpush1.bf16.msra.mxu0 %v1735
    %1745 = vmatprep.subr.bf16.mxu0 0
    %1746 = vmatpush1.bf16.msra.mxu0 0
    %1747 = vmatprep.subr.bf16.mxu0 0
    %1748 = vmatpush1.bf16.msra.mxu0 0
    %1749 = vmatprep.subr.bf16.mxu0 0
    %1750 = vmatpush1.bf16.msra.mxu0 0
    %1751 = vmatprep.subr.bf16.mxu0 0
    %1752 = vmatpush1.bf16.msra.mxu0 0
    %1753 = vmatprep.subr.bf16.mxu0 0
    %1754 = vmatpush1.bf16.msra.mxu0 0
    %1755 = vmatprep.subr.bf16.mxu0 0
    %1756 = vmatpush1.bf16.msra.mxu0 0
    %1757 = vmatprep.subr.bf16.mxu0 0
    %1758 = vmatpush1.bf16.msra.mxu0 0
    %1759 = vmatprep.subr.bf16.mxu0 0
    %1760 = vmatpush1.bf16.msra.mxu0 0
    %1761 = vmatprep.subr.bf16.mxu0 0
    %1762 = vmatpush1.bf16.msra.mxu0 0
    %1763 = vmatprep.subr.bf16.mxu0 0
    %1764 = vmatpush1.bf16.msra.mxu0 0
    %1765 = vmatprep.subr.bf16.mxu0 0
    %1766 = vmatpush1.bf16.msra.mxu0 0
    %1767 = vmatprep.subr.bf16.mxu0 0
    %1768 = vmatpush1.bf16.msra.mxu0 0
    %1769 = vmatprep.subr.bf16.mxu0 0
    %1770 = vmatpush1.bf16.msra.mxu0 0
    %1771 = vmatprep.subr.bf16.mxu0 0
    %1772 = vmatpush1.bf16.msra.mxu0 0
    %1773 = vmatprep.mubr.bf16.mxu0 0
    %1774 = vmatmul.mubr.bf16.gmra.mrb[0].mxu0 %v1739
    %v1775 = vpop.f32.mrb[0].mxu0
    %v1776 = vadd.f32 %v1725, %v1775
    %v1777 = vpop.f32.mrb[0].mxu0
    %v1778 = vpop.f32.mrb[0].mxu0
    %v1779 = vadd.f32 %v1725, %v1778
    %v1780 = vpop.f32.mrb[0].mxu0
    %1781 = vdwg.mxu0
    %v1782 = vmax.f32 %v1776, 0.0
    %v1783 = vmax.f32 %v1779, 0.0
    %v1784 = vpack.c.bf16 %v1783, %v1782
    %s1785 = scalar_lea.vmem %s12, 32
    %v1786 = vld [vmem:[%s1785] sm:$0xf]
    %v1787 = vld [vmem:[%s1785 + $0x4] sm:$0xf]
    %v1788 = vld [vmem:[%s1785 + $0x8] sm:$0xf]
    %v1789 = vld [vmem:[%s1785 + $0xc] sm:$0xf]
    %v1790 = vld [vmem:[%s13 + $0x2] sm:$0x1]
    %v1791 = vlaneseq
    %v1792 = vshrl.u32 %v1791, 7
    %v1793 = vsub.s32 0, %v1792
    %v1794 = vrot.slane %v1790, %v1793
    %v1799 = vunpack.c.l.b16 %v1786
    %v1800 = vunpack.c.l.b16 %v1787
    %v1801 = vunpack.c.l.b16 %v1788
    %v1802 = vunpack.c.l.b16 %v1789
    %v1803 = vpack.c.b16 %v1800, %v1799
    %v1804 = vpack.c.b16 %v1802, %v1801
    %v1808 = vsel %vm181, %v1784, 0
    %1810 = vmatprep.subr.bf16.mxu0 0
    %1811 = vmatpush1.bf16.msra.mxu0 %v1803
    %1812 = vmatprep.subr.bf16.mxu0 0
    %1813 = vmatpush1.bf16.msra.mxu0 %v1804
    %1814 = vmatprep.subr.bf16.mxu0 0
    %1815 = vmatpush1.bf16.msra.mxu0 0
    %1816 = vmatprep.subr.bf16.mxu0 0
    %1817 = vmatpush1.bf16.msra.mxu0 0
    %1818 = vmatprep.subr.bf16.mxu0 0
    %1819 = vmatpush1.bf16.msra.mxu0 0
    %1820 = vmatprep.subr.bf16.mxu0 0
    %1821 = vmatpush1.bf16.msra.mxu0 0
    %1822 = vmatprep.subr.bf16.mxu0 0
    %1823 = vmatpush1.bf16.msra.mxu0 0
    %1824 = vmatprep.subr.bf16.mxu0 0
    %1825 = vmatpush1.bf16.msra.mxu0 0
    %1826 = vmatprep.subr.bf16.mxu0 0
    %1827 = vmatpush1.bf16.msra.mxu0 0
    %1828 = vmatprep.subr.bf16.mxu0 0
    %1829 = vmatpush1.bf16.msra.mxu0 0
    %1830 = vmatprep.subr.bf16.mxu0 0
    %1831 = vmatpush1.bf16.msra.mxu0 0
    %1832 = vmatprep.subr.bf16.mxu0 0
    %1833 = vmatpush1.bf16.msra.mxu0 0
    %1834 = vmatprep.subr.bf16.mxu0 0
    %1835 = vmatpush1.bf16.msra.mxu0 0
    %1836 = vmatprep.subr.bf16.mxu0 0
    %1837 = vmatpush1.bf16.msra.mxu0 0
    %1838 = vmatprep.subr.bf16.mxu0 0
    %1839 = vmatpush1.bf16.msra.mxu0 0
    %1840 = vmatprep.subr.bf16.mxu0 0
    %1841 = vmatpush1.bf16.msra.mxu0 0
    %1842 = vmatprep.mubr.bf16.mxu0 0
    %1843 = vmatmul.mubr.bf16.gmra.mrb[0].mxu0 %v1808
    %v1844 = vpop.f32.mrb[0].mxu0
    %v1845 = vadd.f32 %v1794, %v1844
    %v1846 = vpop.f32.mrb[0].mxu0
    %v1847 = vpop.f32.mrb[0].mxu0
    %v1848 = vadd.f32 %v1794, %v1847
    %v1849 = vpop.f32.mrb[0].mxu0
    %1850 = vdwg.mxu0
    %v1851 = vmax.f32 %v1845, 0.0
    %v1852 = vmax.f32 %v1848, 0.0
    %v1854 = vrot.slane %v1852, 7
    %vm1856 = vcmask 1040384
    %v1857 = vsel %vm1856, %v1851, %v1854
    %v1858 = vpack.c.bf16 %v1857, %v1857
    %v1859 = vld [vmem:[%s14] sm:$0xf]
    %v1860 = vld [vmem:[%s14 + $0x4] sm:$0xf]
    %v1861 = vld [vmem:[%s14 + $0x8] sm:$0xf]
    %v1862 = vld [vmem:[%s14 + $0xc] sm:$0xf]
    %v1863 = vld [vmem:[%s15] sm:$0x1]
    %v1865 = vlaneseq
    %v1866 = vshrl.u32 %v1865, 7
    %v1867 = vsub.s32 0, %v1866
    %v1868 = vrot.slane %v1863, %v1867
    %v1874 = vunpack.c.l.b16 %v1859
    %v1875 = vunpack.c.l.b16 %v1860
    %v1876 = vunpack.c.l.b16 %v1861
    %v1877 = vunpack.c.l.b16 %v1862
    %v1878 = vpack.c.b16 %v1875, %v1874
    %v1879 = vpack.c.b16 %v1877, %v1876
    %v1883 = vsel %vm181, %v1858, 0
    %1885 = vmatprep.subr.bf16.mxu0 0
    %1886 = vmatpush1.bf16.msra.mxu0 %v1878
    %1887 = vmatprep.subr.bf16.mxu0 0
    %1888 = vmatpush1.bf16.msra.mxu0 %v1879
    %1889 = vmatprep.subr.bf16.mxu0 0
    %1890 = vmatpush1.bf16.msra.mxu0 0
    %1891 = vmatprep.subr.bf16.mxu0 0
    %1892 = vmatpush1.bf16.msra.mxu0 0
    %1893 = vmatprep.subr.bf16.mxu0 0
    %1894 = vmatpush1.bf16.msra.mxu0 0
    %1895 = vmatprep.subr.bf16.mxu0 0
    %1896 = vmatpush1.bf16.msra.mxu0 0
    %1897 = vmatprep.subr.bf16.mxu0 0
    %1898 = vmatpush1.bf16.msra.mxu0 0
    %1899 = vmatprep.subr.bf16.mxu0 0
    %1900 = vmatpush1.bf16.msra.mxu0 0
    %1901 = vmatprep.subr.bf16.mxu0 0
    %1902 = vmatpush1.bf16.msra.mxu0 0
    %1903 = vmatprep.subr.bf16.mxu0 0
    %1904 = vmatpush1.bf16.msra.mxu0 0
    %1905 = vmatprep.subr.bf16.mxu0 0
    %1906 = vmatpush1.bf16.msra.mxu0 0
    %1907 = vmatprep.subr.bf16.mxu0 0
    %1908 = vmatpush1.bf16.msra.mxu0 0
    %1909 = vmatprep.subr.bf16.mxu0 0
    %1910 = vmatpush1.bf16.msra.mxu0 0
    %1911 = vmatprep.subr.bf16.mxu0 0
    %1912 = vmatpush1.bf16.msra.mxu0 0
    %1913 = vmatprep.subr.bf16.mxu0 0
    %1914 = vmatpush1.bf16.msra.mxu0 0
    %1915 = vmatprep.subr.bf16.mxu0 0
    %1916 = vmatpush1.bf16.msra.mxu0 0
    %1917 = vmatprep.mubr.bf16.mxu0 0
    %1918 = vmatmul.mubr.bf16.gmra.mrb[0].mxu0 %v1883
    %v1919 = vpop.f32.mrb[0].mxu0
    %v1920 = vadd.f32 %v1868, %v1919
    %v1921 = vpop.f32.mrb[0].mxu0
    %v1922 = vpop.f32.mrb[0].mxu0
    %v1923 = vpop.f32.mrb[0].mxu0
    %1924 = vdwg.mxu0
    %vm1925 = vcmask 1041408
    %v1926 = vsel %vm1925, %v1920, -inf
    %1927 = vmax.xlane.f32.xlu0 %v1926
    %v1928 = vpop.xlane.xlu0 %1927
    %v1929 = vsub.f32 %v1920, %v1928
    %v1930 = vmul.f32 %v1929, 1.442695
    %v1931 = vpow.pop %v1930
    %v1932 = vsel %vm1925, %v1931, 0.0
    %1933 = vadd.xlane.f32.xlu0 %v1932
    %v1934 = vpop.xlane.xlu0 %1933
    %v1935 = vrcp.pop %v1934
    %v1936 = vmul.f32 %v1931, %v1935
    %1937 = vst [vmem:[#allocation2] sm:$0x3] %v1936
    // Predicated region
    $region66: #{tpu_custom_call.1} parent=1 // pred_check
      _
    $region67: #{tpu_custom_call.1} parent=1 // pred_check_branch
      %1939 = sbr.rel (0) target = $region69
    $region68: #{tpu_custom_call.1} parent=1 // pred_region
      %s1941 = ssub.s32 32, 32
      %1942 = vsyncadd [#allocation3], %s1941
      %s1944 = sshll.u32 [#allocation2], 4
      %s1945 = int_to_ptr.vmem [resolvable:$true] %s1944
      %1947 = dma.vmem_to_hbm [thread:$0]  %s1945, 32, %s16, [#allocation3]
    $region69: #{tpu_custom_call.1} parent=1 // pred_fallthru
      _
    // Predicated region
    $region70: #{tpu_custom_call.1} parent=1 // pred_check
      _
    $region71: #{tpu_custom_call.1} parent=1 // pred_check_branch
      %1949 = sbr.rel (0) target = $region73
    $region72: #{tpu_custom_call.1} parent=1 // pred_region
      %1950 = dma.done [#allocation3], 32
    $region73: #{tpu_custom_call.1} parent=1 // pred_fallthru
      _
    %1951 = vsyncpa [#allocation3], 1

</llo_original>
